<compile_context>
chip_gen: v6e
topology: v6e:2x2x1
jax: 0.10.0
libtpu: 0.0.40
codegen_flags: <defaults>
</compile_context>

<pallas_src>
import functools

import jax
import jax.numpy as jnp
from jax.experimental import pallas as pl
from jax.experimental.pallas import tpu as pltpu


def num_channels_to_num_groups(num_channels):
    if num_channels < 8:
        return 1
    if num_channels < 32:
        return 2
    if num_channels < 64:
        return 4
    if num_channels < 128:
        return 8
    if num_channels < 256:
        return 16
    return 32


def _leaky(x):
    return jnp.where(x > 0, x, 0.2 * x)


def _group_norm(h, gamma, beta, member_scaled, eps=1e-5):
    """GroupNorm on (C, HW) data (channels on sublanes, pixels lane-dense).

    Per-channel sum and sum-of-squares (one lane reduction each) are packed
    into a single (C, 2) operand; the per-group combine is one tiny dot with a
    precomputed group-membership matrix that already folds 1/(cpg*HW).
    """
    ch_s = jnp.sum(h, axis=1, keepdims=True)            # (C, 1)
    ch_ss = jnp.sum(h * h, axis=1, keepdims=True)        # (C, 1)
    stats = jnp.concatenate([ch_s, ch_ss], axis=1)        # (C, 2)
    g = jnp.dot(member_scaled, stats,
                preferred_element_type=jnp.float32)       # (C, 2): [mean, E[x^2]]
    mean = g[:, 0:1]
    ex2 = g[:, 1:2]
    var = jnp.maximum(ex2 - mean * mean, 0.0)              # clamp: single-pass var
    inv = jax.lax.rsqrt(var + eps)
    return (h - mean) * (inv * gamma) + beta


def convblock_kernel(x_ref, g1_ref, b1_ref, w1_ref, g2_ref, b2_ref, w3_ref,
                     g3_ref, b3_ref, w5_ref, mem1_ref, mem2_ref, mem3_ref,
                     m_ref, o_ref, *, H, W):
    HW = H * W

    x = x_ref[0].astype(jnp.float32)                                     # (C, HW)

    # --- GroupNorm -> LeakyReLU -> 1x1 conv:  (F0, C) @ (C, HW) ---
    h = _leaky(_group_norm(x, g1_ref[...], b1_ref[...], mem1_ref[...]))
    h = jnp.dot(w1_ref[...], h, preferred_element_type=jnp.float32)      # (F0, HW)

    # --- GroupNorm -> LeakyReLU ---
    h = _leaky(_group_norm(h, g2_ref[...], b2_ref[...], mem2_ref[...]))

    # --- 3x3 conv, padding=1: 9 accumulated (F1, F0) @ (F0, HW) matmuls over
    #     lane-rolled taps.  Boundary masks are (9, HW) and applied per tap via
    #     sublane broadcast; the center tap is always valid (no mask). ---
    masks = m_ref[...]                                                    # (9, HW)
    shifts = [dy * W + dx for dy in (-1, 0, 1) for dx in (-1, 0, 1)]
    acc = None
    for t, s in enumerate(shifts):
        tap = h if s == 0 else pltpu.roll(h, shift=(-s) % HW, axis=1)    # (F0, HW)
        if s != 0:
            tap = tap * masks[t:t + 1, :]
        contrib = jnp.dot(w3_ref[t], tap,
                          preferred_element_type=jnp.float32)            # (F1, HW)
        acc = contrib if acc is None else acc + contrib
    h = acc                                                               # (F1, HW)

    # --- GroupNorm -> LeakyReLU -> final 1x1 conv:  (C, F1) @ (F1, HW) ---
    h = _leaky(_group_norm(h, g3_ref[...], b3_ref[...], mem3_ref[...]))
    out = jnp.dot(w5_ref[...], h, preferred_element_type=jnp.float32)     # (C, HW)
    o_ref[0] = out.astype(o_ref.dtype)


def _vmem_limit_bytes():
    cap = None
    try:
        info = pltpu.get_tpu_info()
        cap = getattr(info, "vmem_capacity_bytes", None)
    except Exception:
        cap = None
    if not cap:
        cap = 64 * 1024 * 1024          # conservative default (v7x per-TC size)
    return min(int(cap * 0.8), 100 * 1024 * 1024)


def conv_block_2d(x_nchw, params, num_filters):
    N, C, H, W = x_nchw.shape
    F0, F1 = num_filters
    HW = H * W
    g_in = num_channels_to_num_groups(C)
    g_f0 = num_channels_to_num_groups(F0)
    g_f1 = num_channels_to_num_groups(F1)
    assert C % g_in == 0 and F0 % g_f0 == 0 and F1 % g_f1 == 0, (
        "channel counts must be divisible by their GroupNorm group counts")

    g1, b1, w1, g2, b2, w3, g3, b3, w5 = params

    # Free reshapes only (no transposes of activations): kernel works on (C, HW).
    x = x_nchw.reshape(N, C, HW)
    w1_k = w1.reshape(F0, C)                                       # (F0, C)
    w3_k = jnp.transpose(w3, (2, 3, 0, 1)).reshape(9, F1, F0)      # per-tap (F1, F0)
    w5_k = w5.reshape(C, F1)                                       # (C,  F1)
    g1_k, b1_k = g1.reshape(C, 1), b1.reshape(C, 1)
    g2_k, b2_k = g2.reshape(F0, 1), b2.reshape(F0, 1)
    g3_k, b3_k = g3.reshape(F1, 1), b3.reshape(F1, 1)

    # Precomputed group-membership matrices (1/(cpg*HW) folded in) so the kernel
    # never rebuilds them from broadcasted_iota and each GN does a single dot.
    def membership(c, ng):
        cpg = c // ng
        row = jnp.arange(c, dtype=jnp.int32) // cpg
        m = (row[:, None] == row[None, :]).astype(jnp.float32)
        return m / float(cpg * HW)

    mem1 = membership(C, g_in)
    mem2 = membership(F0, g_f0)
    mem3 = membership(F1, g_f1)

    # Static per-tap validity masks for the zero-padded 3x3 conv: (9, HW) only —
    # applied per tap in-kernel with a sublane broadcast.
    hw = jnp.arange(HW, dtype=jnp.int32)
    xpos, ypos = hw % W, hw // W
    rows = []
    for dy in (-1, 0, 1):
        for dx in (-1, 0, 1):
            rows.append(((xpos + dx >= 0) & (xpos + dx < W) &
                         (ypos + dy >= 0) & (ypos + dy < H)).astype(jnp.float32))
    masks = jnp.stack(rows)                                         # (9, HW)

    kern = functools.partial(convblock_kernel, H=H, W=W)

    def invariant(arr):
        nd = arr.ndim
        return pl.BlockSpec(arr.shape, lambda n, _nd=nd: (0,) * _nd,
                            pipeline_mode=pl.Buffered(1))   # single-buffer invariants

    out = pl.pallas_call(
        kern,
        out_shape=jax.ShapeDtypeStruct((N, C, HW), x.dtype),
        grid_spec=pltpu.PrefetchScalarGridSpec(
            num_scalar_prefetch=0,
            grid=(N,),
            in_specs=[
                pl.BlockSpec((1, C, HW), lambda n: (n, 0, 0)),
                invariant(g1_k), invariant(b1_k), invariant(w1_k),
                invariant(g2_k), invariant(b2_k), invariant(w3_k),
                invariant(g3_k), invariant(b3_k), invariant(w5_k),
                invariant(mem1), invariant(mem2), invariant(mem3),
                invariant(masks),
            ],
            out_specs=pl.BlockSpec((1, C, HW), lambda n: (n, 0, 0)),
        ),
        compiler_params=pltpu.CompilerParams(
            dimension_semantics=("parallel",),          # shard batch across TCs (v7x)
            vmem_limit_bytes=_vmem_limit_bytes()),
    )(x, g1_k, b1_k, w1_k, g2_k, b2_k, w3_k, g3_k, b3_k, w5_k,
      mem1, mem2, mem3, masks)
    return out.reshape(N, C, H, W)


# ---------------- pure-JAX reference for validation ----------------
def ref_forward(x, params, num_filters):
    g1, b1, w1, g2, b2, w3, g3, b3, w5 = params
    C = x.shape[1]
    F0, F1 = num_filters

    def gn(h, gamma, beta, ng, eps=1e-5):
        N, Ch, H, W = h.shape
        hg = h.reshape(N, ng, -1)
        m = hg.mean(axis=2, keepdims=True)
        v = ((hg - m) ** 2).mean(axis=2, keepdims=True)
        hn = ((hg - m) * jax.lax.rsqrt(v + eps)).reshape(N, Ch, H, W)
        return hn * gamma.reshape(1, Ch, 1, 1) + beta.reshape(1, Ch, 1, 1)

    def lrelu(h):
        return jnp.where(h > 0, h, 0.2 * h)

    def conv(h, w, pad):
        return jax.lax.conv_general_dilated(
            h, w, (1, 1), [(pad, pad), (pad, pad)],
            dimension_numbers=("NCHW", "OIHW", "NCHW"))

    h = lrelu(gn(x, g1, b1, num_channels_to_num_groups(C)))
    h = conv(h, w1, 0)
    h = lrelu(gn(h, g2, b2, num_channels_to_num_groups(F0)))
    h = conv(h, w3, 1)
    h = lrelu(gn(h, g3, b3, num_channels_to_num_groups(F1)))
    h = conv(h, w5, 0)
    return h


if __name__ == "__main__":
    key = jax.random.PRNGKey(0)
    N, C, H, W = 2, 4, 16, 16
    num_filters = (8, 8)
    F0, F1 = num_filters

    ks = jax.random.split(key, 10)
    x = jax.random.normal(ks[0], (N, C, H, W), jnp.float32)
    params = (
        1.0 + 0.1 * jax.random.normal(ks[1], (C,), jnp.float32),        # GN1 gamma
        0.1 * jax.random.normal(ks[2], (C,), jnp.float32),              # GN1 beta
        0.5 * jax.random.normal(ks[3], (F0, C, 1, 1), jnp.float32),     # conv1x1 w
        1.0 + 0.1 * jax.random.normal(ks[4], (F0,), jnp.float32),       # GN2 gamma
        0.1 * jax.random.normal(ks[5], (F0,), jnp.float32),             # GN2 beta
        0.3 * jax.random.normal(ks[6], (F1, F0, 3, 3), jnp.float32),    # conv3x3 w
        1.0 + 0.1 * jax.random.normal(ks[7], (F1,), jnp.float32),       # GN3 gamma
        0.1 * jax.random.normal(ks[8], (F1,), jnp.float32),             # GN3 beta
        0.5 * jax.random.normal(ks[9], (C, F1, 1, 1), jnp.float32),     # conv1x1 w
    )

    out = jax.block_until_ready(conv_block_2d(x, params, num_filters))
    ref = ref_forward(x, params, num_filters)

    assert out.shape == x.shape, (out.shape, x.shape)
    max_err = float(jnp.max(jnp.abs(out - ref)))
    assert jnp.allclose(out, ref, rtol=1e-4, atol=1e-4), max_err
    print("KERNEL_OK")
</pallas_src>

<mosaic_0001>
module attributes {stable_mosaic.version = 11 : i64} {
  func.func @convblock_kernel(%arg0: i32, %arg1: memref<1x4x256xf32, #tpu.memory_space<vmem>>, %arg2: memref<4x1xf32, #tpu.memory_space<vmem>>, %arg3: memref<4x1xf32, #tpu.memory_space<vmem>>, %arg4: memref<8x4xf32, #tpu.memory_space<vmem>>, %arg5: memref<8x1xf32, #tpu.memory_space<vmem>>, %arg6: memref<8x1xf32, #tpu.memory_space<vmem>>, %arg7: memref<9x8x8xf32, #tpu.memory_space<vmem>>, %arg8: memref<8x1xf32, #tpu.memory_space<vmem>>, %arg9: memref<8x1xf32, #tpu.memory_space<vmem>>, %arg10: memref<4x8xf32, #tpu.memory_space<vmem>>, %arg11: memref<4x4xf32, #tpu.memory_space<vmem>>, %arg12: memref<8x8xf32, #tpu.memory_space<vmem>>, %arg13: memref<8x8xf32, #tpu.memory_space<vmem>>, %arg14: memref<9x256xf32, #tpu.memory_space<vmem>>, %arg15: memref<1x4x256xf32, #tpu.memory_space<vmem>>) attributes {dimension_semantics = [#tpu.dimension_semantics<parallel>], iteration_bounds = array<i64: 2>, scalar_prefetch = 0 : i64, scratch_operands = 0 : i64, tpu.core_type = #tpu.core_type<tc>, window_params = [{transform_indices = @transform_0, window_bounds = array<i64: 1, 4, 256>}, {pipeline_mode = #tpu.pipeline_mode<synchronous>, transform_indices = @transform_1, window_bounds = array<i64: 4, 1>}, {pipeline_mode = #tpu.pipeline_mode<synchronous>, transform_indices = @transform_2, window_bounds = array<i64: 4, 1>}, {pipeline_mode = #tpu.pipeline_mode<synchronous>, transform_indices = @transform_3, window_bounds = array<i64: 8, 4>}, {pipeline_mode = #tpu.pipeline_mode<synchronous>, transform_indices = @transform_4, window_bounds = array<i64: 8, 1>}, {pipeline_mode = #tpu.pipeline_mode<synchronous>, transform_indices = @transform_5, window_bounds = array<i64: 8, 1>}, {pipeline_mode = #tpu.pipeline_mode<synchronous>, transform_indices = @transform_6, window_bounds = array<i64: 9, 8, 8>}, {pipeline_mode = #tpu.pipeline_mode<synchronous>, transform_indices = @transform_7, window_bounds = array<i64: 8, 1>}, {pipeline_mode = #tpu.pipeline_mode<synchronous>, transform_indices = @transform_8, window_bounds = array<i64: 8, 1>}, {pipeline_mode = #tpu.pipeline_mode<synchronous>, transform_indices = @transform_9, window_bounds = array<i64: 4, 8>}, {pipeline_mode = #tpu.pipeline_mode<synchronous>, transform_indices = @transform_10, window_bounds = array<i64: 4, 4>}, {pipeline_mode = #tpu.pipeline_mode<synchronous>, transform_indices = @transform_11, window_bounds = array<i64: 8, 8>}, {pipeline_mode = #tpu.pipeline_mode<synchronous>, transform_indices = @transform_12, window_bounds = array<i64: 8, 8>}, {pipeline_mode = #tpu.pipeline_mode<synchronous>, transform_indices = @transform_13, window_bounds = array<i64: 9, 256>}, {transform_indices = @transform_14, window_bounds = array<i64: 1, 4, 256>}]} {
    %c0 = arith.constant 0 : index
    %c0_0 = arith.constant 0 : index
    %c0_1 = arith.constant 0 : index
    %0 = vector.load %arg1[%c0, %c0_0, %c0_1] : memref<1x4x256xf32, #tpu.memory_space<vmem>>, vector<1x4x256xf32>
    %1 = vector.shape_cast %0 : vector<1x4x256xf32> to vector<4x256xf32>
    %c0_2 = arith.constant 0 : index
    %c0_3 = arith.constant 0 : index
    %2 = vector.load %arg2[%c0_2, %c0_3] : memref<4x1xf32, #tpu.memory_space<vmem>>, vector<4x1xf32>
    %c0_4 = arith.constant 0 : index
    %c0_5 = arith.constant 0 : index
    %3 = vector.load %arg3[%c0_4, %c0_5] : memref<4x1xf32, #tpu.memory_space<vmem>>, vector<4x1xf32>
    %c0_6 = arith.constant 0 : index
    %c0_7 = arith.constant 0 : index
    %4 = vector.load %arg11[%c0_6, %c0_7] : memref<4x4xf32, #tpu.memory_space<vmem>>, vector<4x4xf32>
    %cst = arith.constant dense<0.000000e+00> : vector<4xf32>
    %5 = vector.multi_reduction <add>, %1, %cst [1] : vector<4x256xf32> to vector<4xf32>
    %6 = vector.shape_cast %5 : vector<4xf32> to vector<4x1xf32>
    %7 = arith.mulf %1, %1 : vector<4x256xf32>
    %cst_8 = arith.constant dense<0.000000e+00> : vector<4xf32>
    %8 = vector.multi_reduction <add>, %7, %cst_8 [1] : vector<4x256xf32> to vector<4xf32>
    %9 = vector.shape_cast %8 : vector<4xf32> to vector<4x1xf32>
    %10 = tpu.concatenate %6, %9 in 1 : vector<4x1xf32>, vector<4x1xf32> -> vector<4x2xf32>
    %cst_9 = arith.constant dense<0.000000e+00> : vector<4x2xf32>
    %11 = tpu.matmul %4, %10, %cst_9 {dimension_numbers = #tpu.dot_dimension_numbers<[1], [0], [0], [1], [0, 0, 1, 1], [], []>} : vector<4x4xf32>, vector<4x2xf32>, vector<4x2xf32> -> vector<4x2xf32>
    %12 = vector.extract_strided_slice %11 {offsets = [0, 0], sizes = [4, 1], strides = [1, 1]} : vector<4x2xf32> to vector<4x1xf32>
    %13 = vector.extract_strided_slice %11 {offsets = [0, 1], sizes = [4, 1], strides = [1, 1]} : vector<4x2xf32> to vector<4x1xf32>
    %14 = arith.mulf %12, %12 : vector<4x1xf32>
    %15 = arith.subf %13, %14 : vector<4x1xf32>
    %cst_10 = arith.constant 0.000000e+00 : f32
    %16 = vector.broadcast %cst_10 : f32 to vector<4x1xf32>
    %17 = arith.maximumf %15, %16 : vector<4x1xf32>
    %cst_11 = arith.constant 9.99999974E-6 : f32
    %18 = vector.broadcast %cst_11 : f32 to vector<4x1xf32>
    %19 = arith.addf %17, %18 : vector<4x1xf32>
    %20 = math.rsqrt %19 : vector<4x1xf32>
    %21 = vector.broadcast %12 : vector<4x1xf32> to vector<4x256xf32>
    %22 = arith.subf %1, %21 : vector<4x256xf32>
    %23 = arith.mulf %20, %2 : vector<4x1xf32>
    %24 = vector.broadcast %23 : vector<4x1xf32> to vector<4x256xf32>
    %25 = arith.mulf %22, %24 : vector<4x256xf32>
    %26 = vector.broadcast %3 : vector<4x1xf32> to vector<4x256xf32>
    %27 = arith.addf %25, %26 : vector<4x256xf32>
    %cst_12 = arith.constant 0.000000e+00 : f32
    %28 = vector.broadcast %cst_12 : f32 to vector<4x256xf32>
    %29 = arith.cmpf ogt, %27, %28 : vector<4x256xf32>
    %cst_13 = arith.constant 2.000000e-01 : f32
    %30 = vector.broadcast %cst_13 : f32 to vector<4x256xf32>
    %31 = arith.mulf %30, %27 : vector<4x256xf32>
    %32 = arith.select %29, %27, %31 : vector<4x256xi1>, vector<4x256xf32>
    %c0_14 = arith.constant 0 : index
    %c0_15 = arith.constant 0 : index
    %33 = vector.load %arg4[%c0_14, %c0_15] : memref<8x4xf32, #tpu.memory_space<vmem>>, vector<8x4xf32>
    %cst_16 = arith.constant dense<0.000000e+00> : vector<8x256xf32>
    %34 = tpu.matmul %33, %32, %cst_16 {dimension_numbers = #tpu.dot_dimension_numbers<[1], [0], [0], [1], [0, 0, 1, 1], [], []>} : vector<8x4xf32>, vector<4x256xf32>, vector<8x256xf32> -> vector<8x256xf32>
    %c0_17 = arith.constant 0 : index
    %c0_18 = arith.constant 0 : index
    %35 = vector.load %arg5[%c0_17, %c0_18] : memref<8x1xf32, #tpu.memory_space<vmem>>, vector<8x1xf32>
    %c0_19 = arith.constant 0 : index
    %c0_20 = arith.constant 0 : index
    %36 = vector.load %arg6[%c0_19, %c0_20] : memref<8x1xf32, #tpu.memory_space<vmem>>, vector<8x1xf32>
    %c0_21 = arith.constant 0 : index
    %c0_22 = arith.constant 0 : index
    %37 = vector.load %arg12[%c0_21, %c0_22] : memref<8x8xf32, #tpu.memory_space<vmem>>, vector<8x8xf32>
    %cst_23 = arith.constant dense<0.000000e+00> : vector<8xf32>
    %38 = vector.multi_reduction <add>, %34, %cst_23 [1] : vector<8x256xf32> to vector<8xf32>
    %39 = vector.shape_cast %38 : vector<8xf32> to vector<8x1xf32>
    %40 = arith.mulf %34, %34 : vector<8x256xf32>
    %cst_24 = arith.constant dense<0.000000e+00> : vector<8xf32>
    %41 = vector.multi_reduction <add>, %40, %cst_24 [1] : vector<8x256xf32> to vector<8xf32>
    %42 = vector.shape_cast %41 : vector<8xf32> to vector<8x1xf32>
    %43 = tpu.concatenate %39, %42 in 1 : vector<8x1xf32>, vector<8x1xf32> -> vector<8x2xf32>
    %cst_25 = arith.constant dense<0.000000e+00> : vector<8x2xf32>
    %44 = tpu.matmul %37, %43, %cst_25 {dimension_numbers = #tpu.dot_dimension_numbers<[1], [0], [0], [1], [0, 0, 1, 1], [], []>} : vector<8x8xf32>, vector<8x2xf32>, vector<8x2xf32> -> vector<8x2xf32>
    %45 = vector.extract_strided_slice %44 {offsets = [0, 0], sizes = [8, 1], strides = [1, 1]} : vector<8x2xf32> to vector<8x1xf32>
    %46 = vector.extract_strided_slice %44 {offsets = [0, 1], sizes = [8, 1], strides = [1, 1]} : vector<8x2xf32> to vector<8x1xf32>
    %47 = arith.mulf %45, %45 : vector<8x1xf32>
    %48 = arith.subf %46, %47 : vector<8x1xf32>
    %cst_26 = arith.constant 0.000000e+00 : f32
    %49 = vector.broadcast %cst_26 : f32 to vector<8x1xf32>
    %50 = arith.maximumf %48, %49 : vector<8x1xf32>
    %cst_27 = arith.constant 9.99999974E-6 : f32
    %51 = vector.broadcast %cst_27 : f32 to vector<8x1xf32>
    %52 = arith.addf %50, %51 : vector<8x1xf32>
    %53 = math.rsqrt %52 : vector<8x1xf32>
    %54 = vector.broadcast %45 : vector<8x1xf32> to vector<8x256xf32>
    %55 = arith.subf %34, %54 : vector<8x256xf32>
    %56 = arith.mulf %53, %35 : vector<8x1xf32>
    %57 = vector.broadcast %56 : vector<8x1xf32> to vector<8x256xf32>
    %58 = arith.mulf %55, %57 : vector<8x256xf32>
    %59 = vector.broadcast %36 : vector<8x1xf32> to vector<8x256xf32>
    %60 = arith.addf %58, %59 : vector<8x256xf32>
    %cst_28 = arith.constant 0.000000e+00 : f32
    %61 = vector.broadcast %cst_28 : f32 to vector<8x256xf32>
    %62 = arith.cmpf ogt, %60, %61 : vector<8x256xf32>
    %cst_29 = arith.constant 2.000000e-01 : f32
    %63 = vector.broadcast %cst_29 : f32 to vector<8x256xf32>
    %64 = arith.mulf %63, %60 : vector<8x256xf32>
    %65 = arith.select %62, %60, %64 : vector<8x256xi1>, vector<8x256xf32>
    %c0_30 = arith.constant 0 : index
    %c0_31 = arith.constant 0 : index
    %66 = vector.load %arg14[%c0_30, %c0_31] : memref<9x256xf32, #tpu.memory_space<vmem>>, vector<9x256xf32>
    %c17_i32 = arith.constant 17 : i32
    %67 = tpu.dynamic_rotate %65 by %c17_i32 dim 1 : vector<8x256xf32>, i32 -> vector<8x256xf32>
    %68 = vector.extract_strided_slice %66 {offsets = [0, 0], sizes = [1, 256], strides = [1, 1]} : vector<9x256xf32> to vector<1x256xf32>
    %69 = vector.broadcast %68 : vector<1x256xf32> to vector<8x256xf32>
    %70 = arith.mulf %67, %69 : vector<8x256xf32>
    %c0_32 = arith.constant 0 : index
    %c0_33 = arith.constant 0 : index
    %c0_34 = arith.constant 0 : index
    %71 = vector.load %arg7[%c0_32, %c0_33, %c0_34] : memref<9x8x8xf32, #tpu.memory_space<vmem>>, vector<1x8x8xf32>
    %72 = vector.shape_cast %71 : vector<1x8x8xf32> to vector<8x8xf32>
    %cst_35 = arith.constant dense<0.000000e+00> : vector<8x256xf32>
    %73 = tpu.matmul %72, %70, %cst_35 {dimension_numbers = #tpu.dot_dimension_numbers<[1], [0], [0], [1], [0, 0, 1, 1], [], []>} : vector<8x8xf32>, vector<8x256xf32>, vector<8x256xf32> -> vector<8x256xf32>
    %c16_i32 = arith.constant 16 : i32
    %74 = tpu.dynamic_rotate %65 by %c16_i32 dim 1 : vector<8x256xf32>, i32 -> vector<8x256xf32>
    %75 = vector.extract_strided_slice %66 {offsets = [1, 0], sizes = [1, 256], strides = [1, 1]} : vector<9x256xf32> to vector<1x256xf32>
    %76 = vector.broadcast %75 : vector<1x256xf32> to vector<8x256xf32>
    %77 = arith.mulf %74, %76 : vector<8x256xf32>
    %c1 = arith.constant 1 : index
    %c0_36 = arith.constant 0 : index
    %c0_37 = arith.constant 0 : index
    %78 = vector.load %arg7[%c1, %c0_36, %c0_37] : memref<9x8x8xf32, #tpu.memory_space<vmem>>, vector<1x8x8xf32>
    %79 = vector.shape_cast %78 : vector<1x8x8xf32> to vector<8x8xf32>
    %cst_38 = arith.constant dense<0.000000e+00> : vector<8x256xf32>
    %80 = tpu.matmul %79, %77, %cst_38 {dimension_numbers = #tpu.dot_dimension_numbers<[1], [0], [0], [1], [0, 0, 1, 1], [], []>} : vector<8x8xf32>, vector<8x256xf32>, vector<8x256xf32> -> vector<8x256xf32>
    %81 = arith.addf %73, %80 : vector<8x256xf32>
    %c15_i32 = arith.constant 15 : i32
    %82 = tpu.dynamic_rotate %65 by %c15_i32 dim 1 : vector<8x256xf32>, i32 -> vector<8x256xf32>
    %83 = vector.extract_strided_slice %66 {offsets = [2, 0], sizes = [1, 256], strides = [1, 1]} : vector<9x256xf32> to vector<1x256xf32>
    %84 = vector.broadcast %83 : vector<1x256xf32> to vector<8x256xf32>
    %85 = arith.mulf %82, %84 : vector<8x256xf32>
    %c2 = arith.constant 2 : index
    %c0_39 = arith.constant 0 : index
    %c0_40 = arith.constant 0 : index
    %86 = vector.load %arg7[%c2, %c0_39, %c0_40] : memref<9x8x8xf32, #tpu.memory_space<vmem>>, vector<1x8x8xf32>
    %87 = vector.shape_cast %86 : vector<1x8x8xf32> to vector<8x8xf32>
    %cst_41 = arith.constant dense<0.000000e+00> : vector<8x256xf32>
    %88 = tpu.matmul %87, %85, %cst_41 {dimension_numbers = #tpu.dot_dimension_numbers<[1], [0], [0], [1], [0, 0, 1, 1], [], []>} : vector<8x8xf32>, vector<8x256xf32>, vector<8x256xf32> -> vector<8x256xf32>
    %89 = arith.addf %81, %88 : vector<8x256xf32>
    %c1_i32 = arith.constant 1 : i32
    %90 = tpu.dynamic_rotate %65 by %c1_i32 dim 1 : vector<8x256xf32>, i32 -> vector<8x256xf32>
    %91 = vector.extract_strided_slice %66 {offsets = [3, 0], sizes = [1, 256], strides = [1, 1]} : vector<9x256xf32> to vector<1x256xf32>
    %92 = vector.broadcast %91 : vector<1x256xf32> to vector<8x256xf32>
    %93 = arith.mulf %90, %92 : vector<8x256xf32>
    %c3 = arith.constant 3 : index
    %c0_42 = arith.constant 0 : index
    %c0_43 = arith.constant 0 : index
    %94 = vector.load %arg7[%c3, %c0_42, %c0_43] : memref<9x8x8xf32, #tpu.memory_space<vmem>>, vector<1x8x8xf32>
    %95 = vector.shape_cast %94 : vector<1x8x8xf32> to vector<8x8xf32>
    %cst_44 = arith.constant dense<0.000000e+00> : vector<8x256xf32>
    %96 = tpu.matmul %95, %93, %cst_44 {dimension_numbers = #tpu.dot_dimension_numbers<[1], [0], [0], [1], [0, 0, 1, 1], [], []>} : vector<8x8xf32>, vector<8x256xf32>, vector<8x256xf32> -> vector<8x256xf32>
    %97 = arith.addf %89, %96 : vector<8x256xf32>
    %c4 = arith.constant 4 : index
    %c0_45 = arith.constant 0 : index
    %c0_46 = arith.constant 0 : index
    %98 = vector.load %arg7[%c4, %c0_45, %c0_46] : memref<9x8x8xf32, #tpu.memory_space<vmem>>, vector<1x8x8xf32>
    %99 = vector.shape_cast %98 : vector<1x8x8xf32> to vector<8x8xf32>
    %cst_47 = arith.constant dense<0.000000e+00> : vector<8x256xf32>
    %100 = tpu.matmul %99, %65, %cst_47 {dimension_numbers = #tpu.dot_dimension_numbers<[1], [0], [0], [1], [0, 0, 1, 1], [], []>} : vector<8x8xf32>, vector<8x256xf32>, vector<8x256xf32> -> vector<8x256xf32>
    %101 = arith.addf %97, %100 : vector<8x256xf32>
    %c255_i32 = arith.constant 255 : i32
    %102 = tpu.dynamic_rotate %65 by %c255_i32 dim 1 : vector<8x256xf32>, i32 -> vector<8x256xf32>
    %103 = vector.extract_strided_slice %66 {offsets = [5, 0], sizes = [1, 256], strides = [1, 1]} : vector<9x256xf32> to vector<1x256xf32>
    %104 = vector.broadcast %103 : vector<1x256xf32> to vector<8x256xf32>
    %105 = arith.mulf %102, %104 : vector<8x256xf32>
    %c5 = arith.constant 5 : index
    %c0_48 = arith.constant 0 : index
    %c0_49 = arith.constant 0 : index
    %106 = vector.load %arg7[%c5, %c0_48, %c0_49] : memref<9x8x8xf32, #tpu.memory_space<vmem>>, vector<1x8x8xf32>
    %107 = vector.shape_cast %106 : vector<1x8x8xf32> to vector<8x8xf32>
    %cst_50 = arith.constant dense<0.000000e+00> : vector<8x256xf32>
    %108 = tpu.matmul %107, %105, %cst_50 {dimension_numbers = #tpu.dot_dimension_numbers<[1], [0], [0], [1], [0, 0, 1, 1], [], []>} : vector<8x8xf32>, vector<8x256xf32>, vector<8x256xf32> -> vector<8x256xf32>
    %109 = arith.addf %101, %108 : vector<8x256xf32>
    %c241_i32 = arith.constant 241 : i32
    %110 = tpu.dynamic_rotate %65 by %c241_i32 dim 1 : vector<8x256xf32>, i32 -> vector<8x256xf32>
    %111 = vector.extract_strided_slice %66 {offsets = [6, 0], sizes = [1, 256], strides = [1, 1]} : vector<9x256xf32> to vector<1x256xf32>
    %112 = vector.broadcast %111 : vector<1x256xf32> to vector<8x256xf32>
    %113 = arith.mulf %110, %112 : vector<8x256xf32>
    %c6 = arith.constant 6 : index
    %c0_51 = arith.constant 0 : index
    %c0_52 = arith.constant 0 : index
    %114 = vector.load %arg7[%c6, %c0_51, %c0_52] : memref<9x8x8xf32, #tpu.memory_space<vmem>>, vector<1x8x8xf32>
    %115 = vector.shape_cast %114 : vector<1x8x8xf32> to vector<8x8xf32>
    %cst_53 = arith.constant dense<0.000000e+00> : vector<8x256xf32>
    %116 = tpu.matmul %115, %113, %cst_53 {dimension_numbers = #tpu.dot_dimension_numbers<[1], [0], [0], [1], [0, 0, 1, 1], [], []>} : vector<8x8xf32>, vector<8x256xf32>, vector<8x256xf32> -> vector<8x256xf32>
    %117 = arith.addf %109, %116 : vector<8x256xf32>
    %c240_i32 = arith.constant 240 : i32
    %118 = tpu.dynamic_rotate %65 by %c240_i32 dim 1 : vector<8x256xf32>, i32 -> vector<8x256xf32>
    %119 = vector.extract_strided_slice %66 {offsets = [7, 0], sizes = [1, 256], strides = [1, 1]} : vector<9x256xf32> to vector<1x256xf32>
    %120 = vector.broadcast %119 : vector<1x256xf32> to vector<8x256xf32>
    %121 = arith.mulf %118, %120 : vector<8x256xf32>
    %c7 = arith.constant 7 : index
    %c0_54 = arith.constant 0 : index
    %c0_55 = arith.constant 0 : index
    %122 = vector.load %arg7[%c7, %c0_54, %c0_55] : memref<9x8x8xf32, #tpu.memory_space<vmem>>, vector<1x8x8xf32>
    %123 = vector.shape_cast %122 : vector<1x8x8xf32> to vector<8x8xf32>
    %cst_56 = arith.constant dense<0.000000e+00> : vector<8x256xf32>
    %124 = tpu.matmul %123, %121, %cst_56 {dimension_numbers = #tpu.dot_dimension_numbers<[1], [0], [0], [1], [0, 0, 1, 1], [], []>} : vector<8x8xf32>, vector<8x256xf32>, vector<8x256xf32> -> vector<8x256xf32>
    %125 = arith.addf %117, %124 : vector<8x256xf32>
    %c239_i32 = arith.constant 239 : i32
    %126 = tpu.dynamic_rotate %65 by %c239_i32 dim 1 : vector<8x256xf32>, i32 -> vector<8x256xf32>
    %127 = vector.extract_strided_slice %66 {offsets = [8, 0], sizes = [1, 256], strides = [1, 1]} : vector<9x256xf32> to vector<1x256xf32>
    %128 = vector.broadcast %127 : vector<1x256xf32> to vector<8x256xf32>
    %129 = arith.mulf %126, %128 : vector<8x256xf32>
    %c8 = arith.constant 8 : index
    %c0_57 = arith.constant 0 : index
    %c0_58 = arith.constant 0 : index
    %130 = vector.load %arg7[%c8, %c0_57, %c0_58] : memref<9x8x8xf32, #tpu.memory_space<vmem>>, vector<1x8x8xf32>
    %131 = vector.shape_cast %130 : vector<1x8x8xf32> to vector<8x8xf32>
    %cst_59 = arith.constant dense<0.000000e+00> : vector<8x256xf32>
    %132 = tpu.matmul %131, %129, %cst_59 {dimension_numbers = #tpu.dot_dimension_numbers<[1], [0], [0], [1], [0, 0, 1, 1], [], []>} : vector<8x8xf32>, vector<8x256xf32>, vector<8x256xf32> -> vector<8x256xf32>
    %133 = arith.addf %125, %132 : vector<8x256xf32>
    %c0_60 = arith.constant 0 : index
    %c0_61 = arith.constant 0 : index
    %134 = vector.load %arg8[%c0_60, %c0_61] : memref<8x1xf32, #tpu.memory_space<vmem>>, vector<8x1xf32>
    %c0_62 = arith.constant 0 : index
    %c0_63 = arith.constant 0 : index
    %135 = vector.load %arg9[%c0_62, %c0_63] : memref<8x1xf32, #tpu.memory_space<vmem>>, vector<8x1xf32>
    %c0_64 = arith.constant 0 : index
    %c0_65 = arith.constant 0 : index
    %136 = vector.load %arg13[%c0_64, %c0_65] : memref<8x8xf32, #tpu.memory_space<vmem>>, vector<8x8xf32>
    %cst_66 = arith.constant dense<0.000000e+00> : vector<8xf32>
    %137 = vector.multi_reduction <add>, %133, %cst_66 [1] : vector<8x256xf32> to vector<8xf32>
    %138 = vector.shape_cast %137 : vector<8xf32> to vector<8x1xf32>
    %139 = arith.mulf %133, %133 : vector<8x256xf32>
    %cst_67 = arith.constant dense<0.000000e+00> : vector<8xf32>
    %140 = vector.multi_reduction <add>, %139, %cst_67 [1] : vector<8x256xf32> to vector<8xf32>
    %141 = vector.shape_cast %140 : vector<8xf32> to vector<8x1xf32>
    %142 = tpu.concatenate %138, %141 in 1 : vector<8x1xf32>, vector<8x1xf32> -> vector<8x2xf32>
    %cst_68 = arith.constant dense<0.000000e+00> : vector<8x2xf32>
    %143 = tpu.matmul %136, %142, %cst_68 {dimension_numbers = #tpu.dot_dimension_numbers<[1], [0], [0], [1], [0, 0, 1, 1], [], []>} : vector<8x8xf32>, vector<8x2xf32>, vector<8x2xf32> -> vector<8x2xf32>
    %144 = vector.extract_strided_slice %143 {offsets = [0, 0], sizes = [8, 1], strides = [1, 1]} : vector<8x2xf32> to vector<8x1xf32>
    %145 = vector.extract_strided_slice %143 {offsets = [0, 1], sizes = [8, 1], strides = [1, 1]} : vector<8x2xf32> to vector<8x1xf32>
    %146 = arith.mulf %144, %144 : vector<8x1xf32>
    %147 = arith.subf %145, %146 : vector<8x1xf32>
    %cst_69 = arith.constant 0.000000e+00 : f32
    %148 = vector.broadcast %cst_69 : f32 to vector<8x1xf32>
    %149 = arith.maximumf %147, %148 : vector<8x1xf32>
    %cst_70 = arith.constant 9.99999974E-6 : f32
    %150 = vector.broadcast %cst_70 : f32 to vector<8x1xf32>
    %151 = arith.addf %149, %150 : vector<8x1xf32>
    %152 = math.rsqrt %151 : vector<8x1xf32>
    %153 = vector.broadcast %144 : vector<8x1xf32> to vector<8x256xf32>
    %154 = arith.subf %133, %153 : vector<8x256xf32>
    %155 = arith.mulf %152, %134 : vector<8x1xf32>
    %156 = vector.broadcast %155 : vector<8x1xf32> to vector<8x256xf32>
    %157 = arith.mulf %154, %156 : vector<8x256xf32>
    %158 = vector.broadcast %135 : vector<8x1xf32> to vector<8x256xf32>
    %159 = arith.addf %157, %158 : vector<8x256xf32>
    %cst_71 = arith.constant 0.000000e+00 : f32
    %160 = vector.broadcast %cst_71 : f32 to vector<8x256xf32>
    %161 = arith.cmpf ogt, %159, %160 : vector<8x256xf32>
    %cst_72 = arith.constant 2.000000e-01 : f32
    %162 = vector.broadcast %cst_72 : f32 to vector<8x256xf32>
    %163 = arith.mulf %162, %159 : vector<8x256xf32>
    %164 = arith.select %161, %159, %163 : vector<8x256xi1>, vector<8x256xf32>
    %c0_73 = arith.constant 0 : index
    %c0_74 = arith.constant 0 : index
    %165 = vector.load %arg10[%c0_73, %c0_74] : memref<4x8xf32, #tpu.memory_space<vmem>>, vector<4x8xf32>
    %cst_75 = arith.constant dense<0.000000e+00> : vector<4x256xf32>
    %166 = tpu.matmul %165, %164, %cst_75 {dimension_numbers = #tpu.dot_dimension_numbers<[1], [0], [0], [1], [0, 0, 1, 1], [], []>} : vector<4x8xf32>, vector<8x256xf32>, vector<4x256xf32> -> vector<4x256xf32>
    %c0_76 = arith.constant 0 : index
    %c0_77 = arith.constant 0 : index
    %c0_78 = arith.constant 0 : index
    %167 = vector.load %arg15[%c0_76, %c0_77, %c0_78] : memref<1x4x256xf32, #tpu.memory_space<vmem>>, vector<1x4x256xf32>
    %168 = vector.shape_cast %167 : vector<1x4x256xf32> to vector<4x256xf32>
    %169 = vector.shape_cast %166 : vector<4x256xf32> to vector<1x4x256xf32>
    tpu.vector_store %arg15[%c0_76, %c0_77, %c0_78], %169 {strides = array<i32>} : memref<1x4x256xf32, #tpu.memory_space<vmem>>, vector<1x4x256xf32>,
    return
  }
  func.func @transform_0(%arg0: i32) -> (i32, i32, i32) {
    %c0_i32 = arith.constant 0 : i32
    %c0_i32_0 = arith.constant 0 : i32
    %c0_i32_1 = arith.constant 0 : i32
    return %arg0, %c0_i32, %c0_i32_0 : i32, i32, i32
  }
  func.func @transform_1(%arg0: i32) -> (i32, i32) {
    %c0_i32 = arith.constant 0 : i32
    %c0_i32_0 = arith.constant 0 : i32
    %c0_i32_1 = arith.constant 0 : i32
    return %c0_i32, %c0_i32_0 : i32, i32
  }
  func.func @transform_2(%arg0: i32) -> (i32, i32) {
    %c0_i32 = arith.constant 0 : i32
    %c0_i32_0 = arith.constant 0 : i32
    %c0_i32_1 = arith.constant 0 : i32
    return %c0_i32, %c0_i32_0 : i32, i32
  }
  func.func @transform_3(%arg0: i32) -> (i32, i32) {
    %c0_i32 = arith.constant 0 : i32
    %c0_i32_0 = arith.constant 0 : i32
    %c0_i32_1 = arith.constant 0 : i32
    return %c0_i32, %c0_i32_0 : i32, i32
  }
  func.func @transform_4(%arg0: i32) -> (i32, i32) {
    %c0_i32 = arith.constant 0 : i32
    %c0_i32_0 = arith.constant 0 : i32
    %c0_i32_1 = arith.constant 0 : i32
    return %c0_i32, %c0_i32_0 : i32, i32
  }
  func.func @transform_5(%arg0: i32) -> (i32, i32) {
    %c0_i32 = arith.constant 0 : i32
    %c0_i32_0 = arith.constant 0 : i32
    %c0_i32_1 = arith.constant 0 : i32
    return %c0_i32, %c0_i32_0 : i32, i32
  }
  func.func @transform_6(%arg0: i32) -> (i32, i32, i32) {
    %c0_i32 = arith.constant 0 : i32
    %c0_i32_0 = arith.constant 0 : i32
    %c0_i32_1 = arith.constant 0 : i32
    %c0_i32_2 = arith.constant 0 : i32
    return %c0_i32, %c0_i32_0, %c0_i32_1 : i32, i32, i32
  }
  func.func @transform_7(%arg0: i32) -> (i32, i32) {
    %c0_i32 = arith.constant 0 : i32
    %c0_i32_0 = arith.constant 0 : i32
    %c0_i32_1 = arith.constant 0 : i32
    return %c0_i32, %c0_i32_0 : i32, i32
  }
  func.func @transform_8(%arg0: i32) -> (i32, i32) {
    %c0_i32 = arith.constant 0 : i32
    %c0_i32_0 = arith.constant 0 : i32
    %c0_i32_1 = arith.constant 0 : i32
    return %c0_i32, %c0_i32_0 : i32, i32
  }
  func.func @transform_9(%arg0: i32) -> (i32, i32) {
    %c0_i32 = arith.constant 0 : i32
    %c0_i32_0 = arith.constant 0 : i32
    %c0_i32_1 = arith.constant 0 : i32
    return %c0_i32, %c0_i32_0 : i32, i32
  }
  func.func @transform_10(%arg0: i32) -> (i32, i32) {
    %c0_i32 = arith.constant 0 : i32
    %c0_i32_0 = arith.constant 0 : i32
    %c0_i32_1 = arith.constant 0 : i32
    return %c0_i32, %c0_i32_0 : i32, i32
  }
  func.func @transform_11(%arg0: i32) -> (i32, i32) {
    %c0_i32 = arith.constant 0 : i32
    %c0_i32_0 = arith.constant 0 : i32
    %c0_i32_1 = arith.constant 0 : i32
    return %c0_i32, %c0_i32_0 : i32, i32
  }
  func.func @transform_12(%arg0: i32) -> (i32, i32) {
    %c0_i32 = arith.constant 0 : i32
    %c0_i32_0 = arith.constant 0 : i32
    %c0_i32_1 = arith.constant 0 : i32
    return %c0_i32, %c0_i32_0 : i32, i32
  }
  func.func @transform_13(%arg0: i32) -> (i32, i32) {
    %c0_i32 = arith.constant 0 : i32
    %c0_i32_0 = arith.constant 0 : i32
    %c0_i32_1 = arith.constant 0 : i32
    return %c0_i32, %c0_i32_0 : i32, i32
  }
  func.func @transform_14(%arg0: i32) -> (i32, i32, i32) {
    %c0_i32 = arith.constant 0 : i32
    %c0_i32_0 = arith.constant 0 : i32
    %c0_i32_1 = arith.constant 0 : i32
    return %arg0, %c0_i32, %c0_i32_0 : i32, i32, i32
  }
}

</mosaic_0001>

<llo_original>
// kernel: tpu_custom_call.1
$region0: #{tpu_custom_call.1}
  #allocation0 [shape = 'u32[]', space=smem, size = 0x4, offset = 0x4, fixed_abs, tag = 'smem constant byte address 0x4 - core index']
  #allocation1 [shape = 'u32[144,128]{1,0:T(1,128)}', space=vmem, size = 0x12000, scoped, tag = 'internal scratch']
  %s0 = inlined_call_operand.vmem [shape: f32[2,4,256], index: 0, kind: input, shape index: {}]
  %s1 = inlined_call_operand.vmem [shape: f32[4,1], index: 1, kind: input, shape index: {}]
  %s2 = inlined_call_operand.vmem [shape: f32[4,1], index: 2, kind: input, shape index: {}]
  %s3 = inlined_call_operand.vmem [shape: f32[8,4], index: 3, kind: input, shape index: {}]
  %s4 = inlined_call_operand.vmem [shape: f32[8,1], index: 4, kind: input, shape index: {}]
  %s5 = inlined_call_operand.vmem [shape: f32[8,1], index: 5, kind: input, shape index: {}]
  %s6 = inlined_call_operand.vmem [shape: f32[9,8,8], index: 6, kind: input, shape index: {}]
  %s7 = inlined_call_operand.vmem [shape: f32[8,1], index: 7, kind: input, shape index: {}]
  %s8 = inlined_call_operand.vmem [shape: f32[8,1], index: 8, kind: input, shape index: {}]
  %s9 = inlined_call_operand.vmem [shape: f32[4,8], index: 9, kind: input, shape index: {}]
  %s10 = inlined_call_operand.vmem [shape: f32[4,4], index: 10, kind: input, shape index: {}]
  %s11 = inlined_call_operand.vmem [shape: f32[8,8], index: 11, kind: input, shape index: {}]
  %s12 = inlined_call_operand.vmem [shape: f32[8,8], index: 12, kind: input, shape index: {}]
  %s13 = inlined_call_operand.vmem [shape: f32[9,256], index: 13, kind: input, shape index: {}]
  %s14 = inlined_call_operand.hbm [shape: f32[2,4,256], index: 14, kind: output, shape index: {}]
  %s15 = sld [smem:[#allocation0]]
  $region89: #{tpu_custom_call.1} parent=0
    _
  %s17 = ssub.s32 1, %s15
  %s18 = scalar_select 0, %s17, %s15
  $region1: #{tpu_custom_call.1} parent=0
    #allocation2 [shape = 'u8[8192]{0}', space=vmem, size = 0x2000, scoped, tag = 'output window, operand 0']
    #allocation3 [shape = 's32[2]{0}', space=sflag, size = 0x8, scoped, tag = 'scoped memory for tpu_custom_call.1']
    %19 = vsyncpa [#allocation3], 0
    %s20 = scalar_lea.sflag [#allocation3], 1
    %21 = vsyncpa %s20, 0
    loop: start=0, step=1, limit=4
    $region2: #{tpu_custom_call.1} parent=1 // loop_pre_header
      _
    $region3: #{tpu_custom_call.1} parent=1 // loop_header
      %s23 = sphi 0, %s27
      %p24 = scmp.ge.s32.totalorder %s23, 4
      %s33 = sphi 0, %s35
      %s36 = sphi 0, %s33
      %s37 = sphi 0, %s36
      %s53 = sphi 0, %s37
      %s57 = sphi 0, %s57
      %s59 = sphi 0, %s57
      %s60 = sphi 0, %s59
      %s74 = sphi 0, %s60
      %s78 = sphi 0, %s78
      %s80 = sphi 0, %s78
      %s81 = sphi 0, %s80
      %s95 = sphi 0, %s81
      %s99 = sphi 0, %s99
      %s101 = sphi 0, %s99
      %s102 = sphi 0, %s101
      %s116 = sphi 0, %s102
      %s120 = sphi 0, %s120
      %s122 = sphi 0, %s120
      %s123 = sphi 0, %s122
      %s137 = sphi 0, %s123
      %s141 = sphi 0, %s141
      %s143 = sphi 0, %s141
      %s144 = sphi 0, %s143
      %s158 = sphi 0, %s144
      %s162 = sphi 0, %s162
      %s164 = sphi 0, %s162
      %s165 = sphi 0, %s164
      %s179 = sphi 0, %s165
      %s183 = sphi 0, %s183
      %s185 = sphi 0, %s183
      %s186 = sphi 0, %s185
      %s200 = sphi 0, %s186
      %s204 = sphi 0, %s204
      %s206 = sphi 0, %s204
      %s207 = sphi 0, %s206
      %s221 = sphi 0, %s207
      %s225 = sphi 0, %s225
      %s227 = sphi 0, %s225
      %s228 = sphi 0, %s227
      %s242 = sphi 0, %s228
      %s246 = sphi 0, %s246
      %s248 = sphi 0, %s246
      %s249 = sphi 0, %s248
      %s263 = sphi 0, %s249
      %s267 = sphi 0, %s267
      %s269 = sphi 0, %s267
      %s270 = sphi 0, %s269
      %s284 = sphi 0, %s270
      %s288 = sphi 0, %s288
      %s290 = sphi 0, %s288
      %s291 = sphi 0, %s290
      %s305 = sphi 0, %s291
      %s309 = sphi 0, %s309
      %s311 = sphi 0, %s309
      %s312 = sphi 0, %s311
      %s326 = sphi 0, %s312
      %s332 = sphi 0, %s334
      %s335 = sphi 0, %s332
      %s336 = sphi 0, %s335
      %s352 = sphi 0, %s336
    $region4: #{tpu_custom_call.1} parent=1 // loop_header_branch
      %26 = sbr.rel (%p24) target = $region8
    $region5: #{tpu_custom_call.1} parent=1 // loop_body
      %s28 = ssub.s32 %s23, 1
      %s29 = ssub.s32 %s23, 2
      %s30 = sadd.s32 %s23, 1
      %s31 = ssub.s32 %s23, %s30
      %p32 = scmp.eq.s32.totalorder %s31, 0
      %s34 = sadd.s32 %s33, 1
      %s35 = scalar_select %p32, %s33, %s34
      %p38 = pneg %p32
      %p39 = scmp.eq.s32.totalorder %s23, 1
      %p40 = por %p38, %p39
      %p41 = scmp.ne.s32.totalorder %s33, %s36
      %p42 = scmp.eq.s32.totalorder %s23, 0
      %p43 = por %p41, %p42
      %p44 = scmp.ne.s32.totalorder %s33, %s36
      %p45 = scmp.eq.s32.totalorder %s28, 1
      %p46 = por %p44, %p45
      %p47 = scmp.ne.s32.totalorder %s36, %s37
      %p48 = scmp.eq.s32.totalorder %s28, 0
      %p49 = por %p47, %p48
      %p50 = scmp.ne.s32.totalorder %s36, %s37
      %p51 = scmp.eq.s32.totalorder %s29, 1
      %p52 = por %p50, %p51
      %p54 = scmp.ne.s32.totalorder %s37, %s53
      %p55 = scmp.eq.s32.totalorder %s29, 0
      %p56 = por %p54, %p55
      %s58 = sadd.s32 %s57, 1
      %p61 = scmp.eq.s32.totalorder %s23, 1
      %p62 = scmp.ne.s32.totalorder %s57, %s59
      %p63 = scmp.eq.s32.totalorder %s23, 0
      %p64 = por %p62, %p63
      %p65 = scmp.ne.s32.totalorder %s57, %s59
      %p66 = scmp.eq.s32.totalorder %s28, 1
      %p67 = por %p65, %p66
      %p68 = scmp.ne.s32.totalorder %s59, %s60
      %p69 = scmp.eq.s32.totalorder %s28, 0
      %p70 = por %p68, %p69
      %p71 = scmp.ne.s32.totalorder %s59, %s60
      %p72 = scmp.eq.s32.totalorder %s29, 1
      %p73 = por %p71, %p72
      %p75 = scmp.ne.s32.totalorder %s60, %s74
      %p76 = scmp.eq.s32.totalorder %s29, 0
      %p77 = por %p75, %p76
      %s79 = sadd.s32 %s78, 1
      %p82 = scmp.eq.s32.totalorder %s23, 1
      %p83 = scmp.ne.s32.totalorder %s78, %s80
      %p84 = scmp.eq.s32.totalorder %s23, 0
      %p85 = por %p83, %p84
      %p86 = scmp.ne.s32.totalorder %s78, %s80
      %p87 = scmp.eq.s32.totalorder %s28, 1
      %p88 = por %p86, %p87
      %p89 = scmp.ne.s32.totalorder %s80, %s81
      %p90 = scmp.eq.s32.totalorder %s28, 0
      %p91 = por %p89, %p90
      %p92 = scmp.ne.s32.totalorder %s80, %s81
      %p93 = scmp.eq.s32.totalorder %s29, 1
      %p94 = por %p92, %p93
      %p96 = scmp.ne.s32.totalorder %s81, %s95
      %p97 = scmp.eq.s32.totalorder %s29, 0
      %p98 = por %p96, %p97
      %s100 = sadd.s32 %s99, 1
      %p103 = scmp.eq.s32.totalorder %s23, 1
      %p104 = scmp.ne.s32.totalorder %s99, %s101
      %p105 = scmp.eq.s32.totalorder %s23, 0
      %p106 = por %p104, %p105
      %p107 = scmp.ne.s32.totalorder %s99, %s101
      %p108 = scmp.eq.s32.totalorder %s28, 1
      %p109 = por %p107, %p108
      %p110 = scmp.ne.s32.totalorder %s101, %s102
      %p111 = scmp.eq.s32.totalorder %s28, 0
      %p112 = por %p110, %p111
      %p113 = scmp.ne.s32.totalorder %s101, %s102
      %p114 = scmp.eq.s32.totalorder %s29, 1
      %p115 = por %p113, %p114
      %p117 = scmp.ne.s32.totalorder %s102, %s116
      %p118 = scmp.eq.s32.totalorder %s29, 0
      %p119 = por %p117, %p118
      %s121 = sadd.s32 %s120, 1
      %p124 = scmp.eq.s32.totalorder %s23, 1
      %p125 = scmp.ne.s32.totalorder %s120, %s122
      %p126 = scmp.eq.s32.totalorder %s23, 0
      %p127 = por %p125, %p126
      %p128 = scmp.ne.s32.totalorder %s120, %s122
      %p129 = scmp.eq.s32.totalorder %s28, 1
      %p130 = por %p128, %p129
      %p131 = scmp.ne.s32.totalorder %s122, %s123
      %p132 = scmp.eq.s32.totalorder %s28, 0
      %p133 = por %p131, %p132
      %p134 = scmp.ne.s32.totalorder %s122, %s123
      %p135 = scmp.eq.s32.totalorder %s29, 1
      %p136 = por %p134, %p135
      %p138 = scmp.ne.s32.totalorder %s123, %s137
      %p139 = scmp.eq.s32.totalorder %s29, 0
      %p140 = por %p138, %p139
      %s142 = sadd.s32 %s141, 1
      %p145 = scmp.eq.s32.totalorder %s23, 1
      %p146 = scmp.ne.s32.totalorder %s141, %s143
      %p147 = scmp.eq.s32.totalorder %s23, 0
      %p148 = por %p146, %p147
      %p149 = scmp.ne.s32.totalorder %s141, %s143
      %p150 = scmp.eq.s32.totalorder %s28, 1
      %p151 = por %p149, %p150
      %p152 = scmp.ne.s32.totalorder %s143, %s144
      %p153 = scmp.eq.s32.totalorder %s28, 0
      %p154 = por %p152, %p153
      %p155 = scmp.ne.s32.totalorder %s143, %s144
      %p156 = scmp.eq.s32.totalorder %s29, 1
      %p157 = por %p155, %p156
      %p159 = scmp.ne.s32.totalorder %s144, %s158
      %p160 = scmp.eq.s32.totalorder %s29, 0
      %p161 = por %p159, %p160
      %s163 = sadd.s32 %s162, 1
      %p166 = scmp.eq.s32.totalorder %s23, 1
      %p167 = scmp.ne.s32.totalorder %s162, %s164
      %p168 = scmp.eq.s32.totalorder %s23, 0
      %p169 = por %p167, %p168
      %p170 = scmp.ne.s32.totalorder %s162, %s164
      %p171 = scmp.eq.s32.totalorder %s28, 1
      %p172 = por %p170, %p171
      %p173 = scmp.ne.s32.totalorder %s164, %s165
      %p174 = scmp.eq.s32.totalorder %s28, 0
      %p175 = por %p173, %p174
      %p176 = scmp.ne.s32.totalorder %s164, %s165
      %p177 = scmp.eq.s32.totalorder %s29, 1
      %p178 = por %p176, %p177
      %p180 = scmp.ne.s32.totalorder %s165, %s179
      %p181 = scmp.eq.s32.totalorder %s29, 0
      %p182 = por %p180, %p181
      %s184 = sadd.s32 %s183, 1
      %p187 = scmp.eq.s32.totalorder %s23, 1
      %p188 = scmp.ne.s32.totalorder %s183, %s185
      %p189 = scmp.eq.s32.totalorder %s23, 0
      %p190 = por %p188, %p189
      %p191 = scmp.ne.s32.totalorder %s183, %s185
      %p192 = scmp.eq.s32.totalorder %s28, 1
      %p193 = por %p191, %p192
      %p194 = scmp.ne.s32.totalorder %s185, %s186
      %p195 = scmp.eq.s32.totalorder %s28, 0
      %p196 = por %p194, %p195
      %p197 = scmp.ne.s32.totalorder %s185, %s186
      %p198 = scmp.eq.s32.totalorder %s29, 1
      %p199 = por %p197, %p198
      %p201 = scmp.ne.s32.totalorder %s186, %s200
      %p202 = scmp.eq.s32.totalorder %s29, 0
      %p203 = por %p201, %p202
      %s205 = sadd.s32 %s204, 1
      %p208 = scmp.eq.s32.totalorder %s23, 1
      %p209 = scmp.ne.s32.totalorder %s204, %s206
      %p210 = scmp.eq.s32.totalorder %s23, 0
      %p211 = por %p209, %p210
      %p212 = scmp.ne.s32.totalorder %s204, %s206
      %p213 = scmp.eq.s32.totalorder %s28, 1
      %p214 = por %p212, %p213
      %p215 = scmp.ne.s32.totalorder %s206, %s207
      %p216 = scmp.eq.s32.totalorder %s28, 0
      %p217 = por %p215, %p216
      %p218 = scmp.ne.s32.totalorder %s206, %s207
      %p219 = scmp.eq.s32.totalorder %s29, 1
      %p220 = por %p218, %p219
      %p222 = scmp.ne.s32.totalorder %s207, %s221
      %p223 = scmp.eq.s32.totalorder %s29, 0
      %p224 = por %p222, %p223
      %s226 = sadd.s32 %s225, 1
      %p229 = scmp.eq.s32.totalorder %s23, 1
      %p230 = scmp.ne.s32.totalorder %s225, %s227
      %p231 = scmp.eq.s32.totalorder %s23, 0
      %p232 = por %p230, %p231
      %p233 = scmp.ne.s32.totalorder %s225, %s227
      %p234 = scmp.eq.s32.totalorder %s28, 1
      %p235 = por %p233, %p234
      %p236 = scmp.ne.s32.totalorder %s227, %s228
      %p237 = scmp.eq.s32.totalorder %s28, 0
      %p238 = por %p236, %p237
      %p239 = scmp.ne.s32.totalorder %s227, %s228
      %p240 = scmp.eq.s32.totalorder %s29, 1
      %p241 = por %p239, %p240
      %p243 = scmp.ne.s32.totalorder %s228, %s242
      %p244 = scmp.eq.s32.totalorder %s29, 0
      %p245 = por %p243, %p244
      %s247 = sadd.s32 %s246, 1
      %p250 = scmp.eq.s32.totalorder %s23, 1
      %p251 = scmp.ne.s32.totalorder %s246, %s248
      %p252 = scmp.eq.s32.totalorder %s23, 0
      %p253 = por %p251, %p252
      %p254 = scmp.ne.s32.totalorder %s246, %s248
      %p255 = scmp.eq.s32.totalorder %s28, 1
      %p256 = por %p254, %p255
      %p257 = scmp.ne.s32.totalorder %s248, %s249
      %p258 = scmp.eq.s32.totalorder %s28, 0
      %p259 = por %p257, %p258
      %p260 = scmp.ne.s32.totalorder %s248, %s249
      %p261 = scmp.eq.s32.totalorder %s29, 1
      %p262 = por %p260, %p261
      %p264 = scmp.ne.s32.totalorder %s249, %s263
      %p265 = scmp.eq.s32.totalorder %s29, 0
      %p266 = por %p264, %p265
      %s268 = sadd.s32 %s267, 1
      %p271 = scmp.eq.s32.totalorder %s23, 1
      %p272 = scmp.ne.s32.totalorder %s267, %s269
      %p273 = scmp.eq.s32.totalorder %s23, 0
      %p274 = por %p272, %p273
      %p275 = scmp.ne.s32.totalorder %s267, %s269
      %p276 = scmp.eq.s32.totalorder %s28, 1
      %p277 = por %p275, %p276
      %p278 = scmp.ne.s32.totalorder %s269, %s270
      %p279 = scmp.eq.s32.totalorder %s28, 0
      %p280 = por %p278, %p279
      %p281 = scmp.ne.s32.totalorder %s269, %s270
      %p282 = scmp.eq.s32.totalorder %s29, 1
      %p283 = por %p281, %p282
      %p285 = scmp.ne.s32.totalorder %s270, %s284
      %p286 = scmp.eq.s32.totalorder %s29, 0
      %p287 = por %p285, %p286
      %s289 = sadd.s32 %s288, 1
      %p292 = scmp.eq.s32.totalorder %s23, 1
      %p293 = scmp.ne.s32.totalorder %s288, %s290
      %p294 = scmp.eq.s32.totalorder %s23, 0
      %p295 = por %p293, %p294
      %p296 = scmp.ne.s32.totalorder %s288, %s290
      %p297 = scmp.eq.s32.totalorder %s28, 1
      %p298 = por %p296, %p297
      %p299 = scmp.ne.s32.totalorder %s290, %s291
      %p300 = scmp.eq.s32.totalorder %s28, 0
      %p301 = por %p299, %p300
      %p302 = scmp.ne.s32.totalorder %s290, %s291
      %p303 = scmp.eq.s32.totalorder %s29, 1
      %p304 = por %p302, %p303
      %p306 = scmp.ne.s32.totalorder %s291, %s305
      %p307 = scmp.eq.s32.totalorder %s29, 0
      %p308 = por %p306, %p307
      %s310 = sadd.s32 %s309, 1
      %p313 = scmp.eq.s32.totalorder %s23, 1
      %p314 = scmp.ne.s32.totalorder %s309, %s311
      %p315 = scmp.eq.s32.totalorder %s23, 0
      %p316 = por %p314, %p315
      %p317 = scmp.ne.s32.totalorder %s309, %s311
      %p318 = scmp.eq.s32.totalorder %s28, 1
      %p319 = por %p317, %p318
      %p320 = scmp.ne.s32.totalorder %s311, %s312
      %p321 = scmp.eq.s32.totalorder %s28, 0
      %p322 = por %p320, %p321
      %p323 = scmp.ne.s32.totalorder %s311, %s312
      %p324 = scmp.eq.s32.totalorder %s29, 1
      %p325 = por %p323, %p324
      %p327 = scmp.ne.s32.totalorder %s312, %s326
      %p328 = scmp.eq.s32.totalorder %s29, 0
      %p329 = por %p327, %p328
      %s330 = ssub.s32 %s23, %s30
      %p331 = scmp.eq.s32.totalorder %s330, 0
      %s333 = sadd.s32 %s332, 1
      %s334 = scalar_select %p331, %s332, %s333
      %p337 = pneg %p331
      %p338 = scmp.eq.s32.totalorder %s23, 1
      %p339 = por %p337, %p338
      %p340 = scmp.ne.s32.totalorder %s332, %s335
      %p341 = scmp.eq.s32.totalorder %s23, 0
      %p342 = por %p340, %p341
      %p343 = scmp.ne.s32.totalorder %s332, %s335
      %p344 = scmp.eq.s32.totalorder %s28, 1
      %p345 = por %p343, %p344
      %p346 = scmp.ne.s32.totalorder %s335, %s336
      %p347 = scmp.eq.s32.totalorder %s28, 0
      %p348 = por %p346, %p347
      %p349 = scmp.ne.s32.totalorder %s335, %s336
      %p350 = scmp.eq.s32.totalorder %s29, 1
      %p351 = por %p349, %p350
      %p353 = scmp.ne.s32.totalorder %s336, %s352
      %p354 = scmp.eq.s32.totalorder %s29, 0
      %p355 = por %p353, %p354
      %p356 = scmp.le.s32.totalorder 1, %s23
      %p357 = scmp.lt.s32.totalorder %s23, 3
      %p358 = pnand %p356, %p357
      %p359 = pneg %p358
      // Predicated region
      $region9: #{tpu_custom_call.1} parent=5 // pred_check
        _
      $region10: #{tpu_custom_call.1} parent=5 // pred_check_branch
        %361 = sbr.rel (%p358) target = $region12
      $region11: #{tpu_custom_call.1} parent=5 // pred_region
        %s362 = ssub.s32 %s23, 1
        // Predicated region
        $region13: #{tpu_custom_call.1} parent=11 // pred_check
          %p363 = pneg %p70
        $region14: #{tpu_custom_call.1} parent=11 // pred_check_branch
          %365 = sbr.rel (%p363) target = $region16
        $region15: #{tpu_custom_call.1} parent=11 // pred_region
          _
        $region16: #{tpu_custom_call.1} parent=11 // pred_fallthru
          _
        // Predicated region
        $region17: #{tpu_custom_call.1} parent=11 // pred_check
          %p366 = pneg %p91
        $region18: #{tpu_custom_call.1} parent=11 // pred_check_branch
          %368 = sbr.rel (%p366) target = $region20
        $region19: #{tpu_custom_call.1} parent=11 // pred_region
          _
        $region20: #{tpu_custom_call.1} parent=11 // pred_fallthru
          _
        // Predicated region
        $region21: #{tpu_custom_call.1} parent=11 // pred_check
          %p369 = pneg %p112
        $region22: #{tpu_custom_call.1} parent=11 // pred_check_branch
          %371 = sbr.rel (%p369) target = $region24
        $region23: #{tpu_custom_call.1} parent=11 // pred_region
          _
        $region24: #{tpu_custom_call.1} parent=11 // pred_fallthru
          _
        // Predicated region
        $region25: #{tpu_custom_call.1} parent=11 // pred_check
          %p372 = pneg %p133
        $region26: #{tpu_custom_call.1} parent=11 // pred_check_branch
          %374 = sbr.rel (%p372) target = $region28
        $region27: #{tpu_custom_call.1} parent=11 // pred_region
          _
        $region28: #{tpu_custom_call.1} parent=11 // pred_fallthru
          _
        // Predicated region
        $region29: #{tpu_custom_call.1} parent=11 // pred_check
          %p375 = pneg %p154
        $region30: #{tpu_custom_call.1} parent=11 // pred_check_branch
          %377 = sbr.rel (%p375) target = $region32
        $region31: #{tpu_custom_call.1} parent=11 // pred_region
          _
        $region32: #{tpu_custom_call.1} parent=11 // pred_fallthru
          _
        // Predicated region
        $region33: #{tpu_custom_call.1} parent=11 // pred_check
          %p378 = pneg %p175
        $region34: #{tpu_custom_call.1} parent=11 // pred_check_branch
          %380 = sbr.rel (%p378) target = $region36
        $region35: #{tpu_custom_call.1} parent=11 // pred_region
          _
        $region36: #{tpu_custom_call.1} parent=11 // pred_fallthru
          _
        // Predicated region
        $region37: #{tpu_custom_call.1} parent=11 // pred_check
          %p381 = pneg %p196
        $region38: #{tpu_custom_call.1} parent=11 // pred_check_branch
          %383 = sbr.rel (%p381) target = $region40
        $region39: #{tpu_custom_call.1} parent=11 // pred_region
          _
        $region40: #{tpu_custom_call.1} parent=11 // pred_fallthru
          _
        // Predicated region
        $region41: #{tpu_custom_call.1} parent=11 // pred_check
          %p384 = pneg %p217
        $region42: #{tpu_custom_call.1} parent=11 // pred_check_branch
          %386 = sbr.rel (%p384) target = $region44
        $region43: #{tpu_custom_call.1} parent=11 // pred_region
          _
        $region44: #{tpu_custom_call.1} parent=11 // pred_fallthru
          _
        // Predicated region
        $region45: #{tpu_custom_call.1} parent=11 // pred_check
          %p387 = pneg %p238
        $region46: #{tpu_custom_call.1} parent=11 // pred_check_branch
          %389 = sbr.rel (%p387) target = $region48
        $region47: #{tpu_custom_call.1} parent=11 // pred_region
          _
        $region48: #{tpu_custom_call.1} parent=11 // pred_fallthru
          _
        // Predicated region
        $region49: #{tpu_custom_call.1} parent=11 // pred_check
          %p390 = pneg %p259
        $region50: #{tpu_custom_call.1} parent=11 // pred_check_branch
          %392 = sbr.rel (%p390) target = $region52
        $region51: #{tpu_custom_call.1} parent=11 // pred_region
          _
        $region52: #{tpu_custom_call.1} parent=11 // pred_fallthru
          _
        // Predicated region
        $region53: #{tpu_custom_call.1} parent=11 // pred_check
          %p393 = pneg %p280
        $region54: #{tpu_custom_call.1} parent=11 // pred_check_branch
          %395 = sbr.rel (%p393) target = $region56
        $region55: #{tpu_custom_call.1} parent=11 // pred_region
          _
        $region56: #{tpu_custom_call.1} parent=11 // pred_fallthru
          _
        // Predicated region
        $region57: #{tpu_custom_call.1} parent=11 // pred_check
          %p396 = pneg %p301
        $region58: #{tpu_custom_call.1} parent=11 // pred_check_branch
          %398 = sbr.rel (%p396) target = $region60
        $region59: #{tpu_custom_call.1} parent=11 // pred_region
          _
        $region60: #{tpu_custom_call.1} parent=11 // pred_fallthru
          _
        // Predicated region
        $region61: #{tpu_custom_call.1} parent=11 // pred_check
          %p399 = pneg %p322
        $region62: #{tpu_custom_call.1} parent=11 // pred_check_branch
          %401 = sbr.rel (%p399) target = $region64
        $region63: #{tpu_custom_call.1} parent=11 // pred_region
          _
        $region64: #{tpu_custom_call.1} parent=11 // pred_fallthru
          _
      $region12: #{tpu_custom_call.1} parent=5 // pred_fallthru
        _
      %p402 = scmp.lt.s32.totalorder %s23, 2
      // Predicated region
      $region65: #{tpu_custom_call.1} parent=5 // pred_check
        %p403 = pneg %p402
      $region66: #{tpu_custom_call.1} parent=5 // pred_check_branch
        %405 = sbr.rel (%p403) target = $region68
      $region67: #{tpu_custom_call.1} parent=5 // pred_region
        // Predicated region
        $region69: #{tpu_custom_call.1} parent=67 // pred_check
          %p406 = pneg %p43
        $region70: #{tpu_custom_call.1} parent=67 // pred_check_branch
          %408 = sbr.rel (%p406) target = $region72
        $region71: #{tpu_custom_call.1} parent=67 // pred_region
          %p409 = scmp.lt.s32.totalorder %s23, 1
          %s410 = scalar_select %p409, %s23, 1
          %s411 = smul.addr %s410, 2
          %s412 = smul.addr %s411, 4
          %s413 = scalar_lea.vmem %s0, %s412
        $region72: #{tpu_custom_call.1} parent=67 // pred_fallthru
          _
      $region68: #{tpu_custom_call.1} parent=5 // pred_fallthru
        _
      %p414 = scmp.le.s32.totalorder 1, %s23
      %p415 = scmp.lt.s32.totalorder %s23, 3
      %p416 = pnand %p414, %p415
      %p417 = pneg %p416
      // Predicated region
      $region73: #{tpu_custom_call.1} parent=5 // pred_check
        _
      $region74: #{tpu_custom_call.1} parent=5 // pred_check_branch
        %419 = sbr.rel (%p416) target = $region76
      $region75: #{tpu_custom_call.1} parent=5 // pred_region
        %s420 = ssub.s32 %s23, 1
        %p421 = scmp.lt.s32.totalorder %s28, 1
        %s422 = scalar_select %p421, %s28, 1
        %s423 = smul.addr %s422, 2
        %s424 = smul.addr %s423, 4
        %s425 = scalar_lea.vmem %s0, %s424
        %p426 = pneg %p49
        %p427 = pneg %p46
        %p428 = pneg %p70
        %p429 = pneg %p67
        %p430 = pneg %p91
        %p431 = pneg %p88
        %p432 = pneg %p112
        %p433 = pneg %p109
        %p434 = pneg %p133
        %p435 = pneg %p130
        %p436 = pneg %p154
        %p437 = pneg %p151
        %p438 = pneg %p175
        %p439 = pneg %p172
        %p440 = pneg %p196
        %p441 = pneg %p193
        %p442 = pneg %p217
        %p443 = pneg %p214
        %p444 = pneg %p238
        %p445 = pneg %p235
        %p446 = pneg %p259
        %p447 = pneg %p256
        %p448 = pneg %p280
        %p449 = pneg %p277
        %p450 = pneg %p301
        %p451 = pneg %p298
        %p452 = pneg %p322
        %p453 = pneg %p319
        %p454 = pneg %p348
        %p455 = pneg %p345
        %s456 = sand.u32 %s335, 1
        %s457 = scalar_lea.sflag [#allocation3], %s456
        %s458 = sand.u32 %s335, 1
        %s459 = smul.addr %s458, 8
        %s460 = scalar_lea.vmem [#allocation2], %s459
        %p461 = scmp.lt.s32.totalorder %s28, 1
        %s462 = scalar_select %p461, %s28, 1
        %s463 = smul.addr %s462, 2
        %s464 = smul.addr %s463, 4
        %s465 = scalar_lea.vmem %s0, %s464
        %v466 = vld [vmem:[%s465] sm:$0xff]
        %v467 = vld [vmem:[%s1] sm:$0xf]
        %v468 = vld [vmem:[%s2] sm:$0xf]
        %v469 = vld [vmem:[%s10] sm:$0xf]
        %v471 = vcombine.high %v466, %v466
        %vm473 = vcmask 1043456
        %v474 = vsel %vm473, %v466, 0.0
        %v475 = vsel %vm473, %v471, 0.0
        %v476 = vadd.f32 %v474, %v475
        %477 = vadd.xlane.f32.xlu0 %v476
        %v478 = vpop.xlane.xlu0 %477
        %v479 = vmul.f32 %v466, %v466
        %v481 = vcombine.high %v479, %v479
        %v483 = vsel %vm473, %v479, 0.0
        %v484 = vsel %vm473, %v481, 0.0
        %v485 = vadd.f32 %v483, %v484
        %486 = vadd.xlane.f32.xlu0 %v485
        %v487 = vpop.xlane.xlu0 %486
        %vm488 = vcmask 7168
        %v489 = vsel %vm488, %v478, %v487
        %vm490 = vcmask 31744
        %v492 = vsel %vm490, %v469, 0
        %v495 = vsel %vm473, %v489, 0
        %497 = vmatprep.subr.mxu0 0.0
        %498 = vmatpush1.msra.mxu0 0.0
        %499 = vmatprep.subr.mxu0 0.0
        %500 = vmatpush1.msra.mxu0 0.0
        %501 = vmatprep.subr.mxu0 0.0
        %502 = vmatpush1.msra.mxu0 0.0
        %503 = vmatprep.subr.mxu0 0.0
        %504 = vmatpush1.msra.mxu0 0.0
        %505 = vmatprep.subr.mxu0 0.0
        %506 = vmatpush1.msra.mxu0 0.0
        %507 = vmatprep.subr.mxu0 0.0
        %508 = vmatpush1.msra.mxu0 0.0
        %509 = vmatprep.subr.mxu0 0.0
        %510 = vmatpush1.msra.mxu0 0.0
        %511 = vmatprep.subr.mxu0 0.0
        %512 = vmatpush1.msra.mxu0 0.0
        %513 = vmatprep.subr.mxu0 0.0
        %514 = vmatpush1.msra.mxu0 0.0
        %515 = vmatprep.subr.mxu0 0.0
        %516 = vmatpush1.msra.mxu0 0.0
        %517 = vmatprep.subr.mxu0 0.0
        %518 = vmatpush1.msra.mxu0 0.0
        %519 = vmatprep.subr.mxu0 0.0
        %520 = vmatpush1.msra.mxu0 0.0
        %521 = vmatprep.subr.mxu0 0.0
        %522 = vmatpush1.msra.mxu0 0.0
        %523 = vmatprep.subr.mxu0 0.0
        %524 = vmatpush1.msra.mxu0 0.0
        %525 = vmatprep.subr.mxu0 0.0
        %526 = vmatpush1.msra.mxu0 0.0
        %527 = vmatprep.subr.mxu0 0.0
        %528 = vmatpush1.msra.mxu0 %v495
        %529 = vmatprep.subr.mxu0 0.0
        %530 = vmatpush2.msra.mxu0 0.0
        %531 = vmatprep.subr.mxu0 0.0
        %532 = vmatpush2.msra.mxu0 0.0
        %533 = vmatprep.subr.mxu0 0.0
        %534 = vmatpush2.msra.mxu0 0.0
        %535 = vmatprep.subr.mxu0 0.0
        %536 = vmatpush2.msra.mxu0 0.0
        %537 = vmatprep.subr.mxu0 0.0
        %538 = vmatpush2.msra.mxu0 0.0
        %539 = vmatprep.subr.mxu0 0.0
        %540 = vmatpush2.msra.mxu0 0.0
        %541 = vmatprep.subr.mxu0 0.0
        %542 = vmatpush2.msra.mxu0 0.0
        %543 = vmatprep.subr.mxu0 0.0
        %544 = vmatpush2.msra.mxu0 0.0
        %545 = vmatprep.subr.mxu0 0.0
        %546 = vmatpush2.msra.mxu0 0.0
        %547 = vmatprep.subr.mxu0 0.0
        %548 = vmatpush2.msra.mxu0 0.0
        %549 = vmatprep.subr.mxu0 0.0
        %550 = vmatpush2.msra.mxu0 0.0
        %551 = vmatprep.subr.mxu0 0.0
        %552 = vmatpush2.msra.mxu0 0.0
        %553 = vmatprep.subr.mxu0 0.0
        %554 = vmatpush2.msra.mxu0 0.0
        %555 = vmatprep.subr.mxu0 0.0
        %556 = vmatpush2.msra.mxu0 0.0
        %557 = vmatprep.subr.mxu0 0.0
        %558 = vmatpush2.msra.mxu0 0.0
        %559 = vmatprep.subr.mxu0 0.0
        %560 = vmatpush2.msra.mxu0 0.0
        %561 = vmatprep.mubr.f32.mxu0 0.0
        %562 = vmatmul.mubr.f32.gmra.mxu0 %v492
        %v563 = vpop.f32.mrf.mxu0
        %v564 = vadd.f32 0.0, %v563
        %v565 = vpop.f32.mrf.mxu0
        %566 = vdwg.mxu0
        %v567 = vmul.f32 %v564, %v564
        %569 = vrot.lane.b32.xlu0 %v567, 1
        %v570 = vpop.permute.xlu0 %569
        %v572 = vsub.f32 %v564, %v570
        %v573 = vmax.f32 %v572, 0.0
        %v574 = vadd.f32 %v573, 1e-05
        %v575 = vrsqrt.pop %v574
        %577 = vset.pattern.permute.xlu0 0
        %578 = vperm.xlu0 %577, %v564
        %v579 = vpop.permute.xlu0 %578
        %v581 = vunpack.c.l.s4 839922192
        %v582 = vunpack.c.0.s8 %v581
        %v583 = vlaneseq
        %v584 = vshrl.u32 %v583, 7
        %v585 = vsub.s32 %v582, %v584
        %v586 = vrot.slane %v579, %v585
        %v588 = vsub.f32 %v466, %v586
        %590 = vrot.lane.b32.xlu0 %v467, 1
        %v591 = vpop.permute.xlu0 %590
        %v593 = vmul.f32 %v575, %v591
        %595 = vset.pattern.permute.xlu0 1
        %596 = vperm.xlu0 %595, %v593
        %v597 = vpop.permute.xlu0 %596
        %v599 = vunpack.c.l.s4 839922192
        %v600 = vunpack.c.0.s8 %v599
        %v601 = vlaneseq
        %v602 = vshrl.u32 %v601, 7
        %v603 = vsub.s32 %v600, %v602
        %v604 = vrot.slane %v597, %v603
        %v606 = vmul.f32 %v588, %v604
        %608 = vset.pattern.permute.xlu0 0
        %609 = vperm.xlu0 %608, %v468
        %v610 = vpop.permute.xlu0 %609
        %v612 = vunpack.c.l.s4 839922192
        %v613 = vunpack.c.0.s8 %v612
        %v614 = vlaneseq
        %v615 = vshrl.u32 %v614, 7
        %v616 = vsub.s32 %v613, %v615
        %v617 = vrot.slane %v610, %v616
        %v619 = vadd.f32 %v606, %v617
        %vm620 = vcmp.gt.f32.partialorder %v619, 0.0
        %v621 = vmul.f32 %v619, 0.2
        %v622 = vsel %vm620, %v619, %v621
        %v623 = vld [vmem:[%s3] sm:$0xff]
        %v625 = vcombine.high %v622, %v622
        %v627 = vsel %vm490, %v623, 0
        %v629 = vsel %vm473, %v622, 0
        %v631 = vsel %vm473, %v625, 0
        %633 = vmatprep.subr.mxu0 0.0
        %634 = vmatpush1.msra.mxu0 0.0
        %635 = vmatprep.subr.mxu0 0.0
        %636 = vmatpush1.msra.mxu0 0.0
        %637 = vmatprep.subr.mxu0 0.0
        %638 = vmatpush1.msra.mxu0 0.0
        %639 = vmatprep.subr.mxu0 0.0
        %640 = vmatpush1.msra.mxu0 0.0
        %641 = vmatprep.subr.mxu0 0.0
        %642 = vmatpush1.msra.mxu0 0.0
        %643 = vmatprep.subr.mxu0 0.0
        %644 = vmatpush1.msra.mxu0 0.0
        %645 = vmatprep.subr.mxu0 0.0
        %646 = vmatpush1.msra.mxu0 0.0
        %647 = vmatprep.subr.mxu0 0.0
        %648 = vmatpush1.msra.mxu0 0.0
        %649 = vmatprep.subr.mxu0 0.0
        %650 = vmatpush1.msra.mxu0 0.0
        %651 = vmatprep.subr.mxu0 0.0
        %652 = vmatpush1.msra.mxu0 0.0
        %653 = vmatprep.subr.mxu0 0.0
        %654 = vmatpush1.msra.mxu0 0.0
        %655 = vmatprep.subr.mxu0 0.0
        %656 = vmatpush1.msra.mxu0 0.0
        %657 = vmatprep.subr.mxu0 0.0
        %658 = vmatpush1.msra.mxu0 0.0
        %659 = vmatprep.subr.mxu0 0.0
        %660 = vmatpush1.msra.mxu0 0.0
        %661 = vmatprep.subr.mxu0 0.0
        %662 = vmatpush1.msra.mxu0 0.0
        %663 = vmatprep.subr.mxu0 %v631
        %664 = vmatpush1.msra.mxu0 %v629
        %665 = vmatprep.subr.mxu0 0.0
        %666 = vmatpush2.msra.mxu0 0.0
        %667 = vmatprep.subr.mxu0 0.0
        %668 = vmatpush2.msra.mxu0 0.0
        %669 = vmatprep.subr.mxu0 0.0
        %670 = vmatpush2.msra.mxu0 0.0
        %671 = vmatprep.subr.mxu0 0.0
        %672 = vmatpush2.msra.mxu0 0.0
        %673 = vmatprep.subr.mxu0 0.0
        %674 = vmatpush2.msra.mxu0 0.0
        %675 = vmatprep.subr.mxu0 0.0
        %676 = vmatpush2.msra.mxu0 0.0
        %677 = vmatprep.subr.mxu0 0.0
        %678 = vmatpush2.msra.mxu0 0.0
        %679 = vmatprep.subr.mxu0 0.0
        %680 = vmatpush2.msra.mxu0 0.0
        %681 = vmatprep.subr.mxu0 0.0
        %682 = vmatpush2.msra.mxu0 0.0
        %683 = vmatprep.subr.mxu0 0.0
        %684 = vmatpush2.msra.mxu0 0.0
        %685 = vmatprep.subr.mxu0 0.0
        %686 = vmatpush2.msra.mxu0 0.0
        %687 = vmatprep.subr.mxu0 0.0
        %688 = vmatpush2.msra.mxu0 0.0
        %689 = vmatprep.subr.mxu0 0.0
        %690 = vmatpush2.msra.mxu0 0.0
        %691 = vmatprep.subr.mxu0 0.0
        %692 = vmatpush2.msra.mxu0 0.0
        %693 = vmatprep.subr.mxu0 0.0
        %694 = vmatpush2.msra.mxu0 0.0
        %695 = vmatprep.subr.mxu0 0.0
        %696 = vmatpush2.msra.mxu0 0.0
        %697 = vmatprep.mubr.f32.mxu0 0.0
        %698 = vmatmul.mubr.f32.gmra.mxu0 %v627
        %v699 = vpop.f32.mrf.mxu0
        %v700 = vadd.f32 0.0, %v699
        %v701 = vpop.f32.mrf.mxu0
        %v702 = vadd.f32 0.0, %v701
        %703 = vdwg.mxu0
        %v704 = vld [vmem:[%s4] sm:$0xff]
        %v705 = vld [vmem:[%s5] sm:$0xff]
        %v706 = vld [vmem:[%s11] sm:$0xff]
        %v707 = vadd.f32 %v700, %v702
        %708 = vadd.xlane.f32.xlu0 %v707
        %v709 = vpop.xlane.xlu0 %708
        %v710 = vmul.f32 %v700, %v700
        %v711 = vmul.f32 %v702, %v702
        %v712 = vadd.f32 %v710, %v711
        %713 = vadd.xlane.f32.xlu0 %v712
        %v714 = vpop.xlane.xlu0 %713
        %v715 = vsel %vm488, %v709, %v714
        %vm716 = vcmask 64512
        %v718 = vsel %vm716, %v706, 0
        %720 = vmatprep.subr.mxu0 0.0
        %721 = vmatpush1.msra.mxu0 0.0
        %722 = vmatprep.subr.mxu0 0.0
        %723 = vmatpush1.msra.mxu0 0.0
        %724 = vmatprep.subr.mxu0 0.0
        %725 = vmatpush1.msra.mxu0 0.0
        %726 = vmatprep.subr.mxu0 0.0
        %727 = vmatpush1.msra.mxu0 0.0
        %728 = vmatprep.subr.mxu0 0.0
        %729 = vmatpush1.msra.mxu0 0.0
        %730 = vmatprep.subr.mxu0 0.0
        %731 = vmatpush1.msra.mxu0 0.0
        %732 = vmatprep.subr.mxu0 0.0
        %733 = vmatpush1.msra.mxu0 0.0
        %734 = vmatprep.subr.mxu0 0.0
        %735 = vmatpush1.msra.mxu0 0.0
        %736 = vmatprep.subr.mxu0 0.0
        %737 = vmatpush1.msra.mxu0 0.0
        %738 = vmatprep.subr.mxu0 0.0
        %739 = vmatpush1.msra.mxu0 0.0
        %740 = vmatprep.subr.mxu0 0.0
        %741 = vmatpush1.msra.mxu0 0.0
        %742 = vmatprep.subr.mxu0 0.0
        %743 = vmatpush1.msra.mxu0 0.0
        %744 = vmatprep.subr.mxu0 0.0
        %745 = vmatpush1.msra.mxu0 0.0
        %746 = vmatprep.subr.mxu0 0.0
        %747 = vmatpush1.msra.mxu0 0.0
        %748 = vmatprep.subr.mxu0 0.0
        %749 = vmatpush1.msra.mxu0 0.0
        %750 = vmatprep.subr.mxu0 0.0
        %751 = vmatpush1.msra.mxu0 %v715
        %752 = vmatprep.subr.mxu0 0.0
        %753 = vmatpush2.msra.mxu0 0.0
        %754 = vmatprep.subr.mxu0 0.0
        %755 = vmatpush2.msra.mxu0 0.0
        %756 = vmatprep.subr.mxu0 0.0
        %757 = vmatpush2.msra.mxu0 0.0
        %758 = vmatprep.subr.mxu0 0.0
        %759 = vmatpush2.msra.mxu0 0.0
        %760 = vmatprep.subr.mxu0 0.0
        %761 = vmatpush2.msra.mxu0 0.0
        %762 = vmatprep.subr.mxu0 0.0
        %763 = vmatpush2.msra.mxu0 0.0
        %764 = vmatprep.subr.mxu0 0.0
        %765 = vmatpush2.msra.mxu0 0.0
        %766 = vmatprep.subr.mxu0 0.0
        %767 = vmatpush2.msra.mxu0 0.0
        %768 = vmatprep.subr.mxu0 0.0
        %769 = vmatpush2.msra.mxu0 0.0
        %770 = vmatprep.subr.mxu0 0.0
        %771 = vmatpush2.msra.mxu0 0.0
        %772 = vmatprep.subr.mxu0 0.0
        %773 = vmatpush2.msra.mxu0 0.0
        %774 = vmatprep.subr.mxu0 0.0
        %775 = vmatpush2.msra.mxu0 0.0
        %776 = vmatprep.subr.mxu0 0.0
        %777 = vmatpush2.msra.mxu0 0.0
        %778 = vmatprep.subr.mxu0 0.0
        %779 = vmatpush2.msra.mxu0 0.0
        %780 = vmatprep.subr.mxu0 0.0
        %781 = vmatpush2.msra.mxu0 0.0
        %782 = vmatprep.subr.mxu0 0.0
        %783 = vmatpush2.msra.mxu0 0.0
        %784 = vmatprep.mubr.f32.mxu0 0.0
        %785 = vmatmul.mubr.f32.gmra.mxu0 %v718
        %v786 = vpop.f32.mrf.mxu0
        %v787 = vadd.f32 0.0, %v786
        %v788 = vpop.f32.mrf.mxu0
        %789 = vdwg.mxu0
        %v790 = vmul.f32 %v787, %v787
        %792 = vrot.lane.b32.xlu0 %v790, 1
        %v793 = vpop.permute.xlu0 %792
        %v795 = vsub.f32 %v787, %v793
        %v796 = vmax.f32 %v795, 0.0
        %v797 = vadd.f32 %v796, 1e-05
        %v798 = vrsqrt.pop %v797
        %800 = vset.pattern.permute.xlu0 0
        %801 = vperm.xlu0 %800, %v787
        %v802 = vpop.permute.xlu0 %801
        %v804 = vsub.f32 %v700, %v802
        %v805 = vsub.f32 %v702, %v802
        %807 = vrot.lane.b32.xlu0 %v704, 1
        %v808 = vpop.permute.xlu0 %807
        %v810 = vmul.f32 %v798, %v808
        %812 = vset.pattern.permute.xlu0 1
        %813 = vperm.xlu0 %812, %v810
        %v814 = vpop.permute.xlu0 %813
        %v816 = vmul.f32 %v804, %v814
        %v817 = vmul.f32 %v805, %v814
        %819 = vset.pattern.permute.xlu0 0
        %820 = vperm.xlu0 %819, %v705
        %v821 = vpop.permute.xlu0 %820
        %v823 = vadd.f32 %v816, %v821
        %v824 = vadd.f32 %v817, %v821
        %vm825 = vcmp.gt.f32.partialorder %v823, 0.0
        %vm826 = vcmp.gt.f32.partialorder %v824, 0.0
        %v827 = vmul.f32 %v823, 0.2
        %v828 = vmul.f32 %v824, 0.2
        %v829 = vsel %vm825, %v823, %v827
        %v830 = vsel %vm826, %v824, %v828
        %v831 = vld [vmem:[%s13] sm:$0xff]
        %v832 = vld [vmem:[%s13 + $0x8] sm:$0xff]
        %v833 = vld [vmem:[%s13 + $0x10] sm:$0x1]
        %v834 = vld [vmem:[%s13 + $0x18] sm:$0x1]
        %835 = vrot.lane.b32.xlu0 %v829, 17
        %v836 = vpop.permute.xlu0 %835
        %837 = vrot.lane.b32.xlu0 %v830, 17
        %v838 = vpop.permute.xlu0 %837
        %v839 = vlaneseq
        %v840 = vand.u32 %v839, 127
        %vm841 = vcmp.lt.s32.totalorder %v840, 17
        %v842 = vsel %vm841, %v836, %v838
        %v843 = vsel %vm841, %v838, %v836
        %v844 = vlaneseq
        %v845 = vshrl.u32 %v844, 7
        %v846 = vsub.s32 0, %v845
        %v847 = vrot.slane %v831, %v846
        %v848 = vlaneseq
        %v849 = vshrl.u32 %v848, 7
        %v850 = vsub.s32 0, %v849
        %v851 = vrot.slane %v832, %v850
        %v852 = vmul.f32 %v843, %v847
        %v853 = vmul.f32 %v842, %v851
        %v854 = vld [vmem:[%s6] sm:$0xff]
        %855 = vrot.lane.b32.xlu0 %v829, 16
        %v856 = vpop.permute.xlu0 %855
        %857 = vrot.lane.b32.xlu0 %v830, 16
        %v858 = vpop.permute.xlu0 %857
        %vm859 = vcmp.lt.s32.totalorder %v840, 16
        %v860 = vsel %vm859, %v856, %v858
        %v861 = vsel %vm859, %v858, %v856
        %v862 = vlaneseq
        %v863 = vshrl.u32 %v862, 7
        %v864 = vsub.s32 1, %v863
        %v865 = vrot.slane %v831, %v864
        %v866 = vlaneseq
        %v867 = vshrl.u32 %v866, 7
        %v868 = vsub.s32 1, %v867
        %v869 = vrot.slane %v832, %v868
        %v870 = vmul.f32 %v861, %v865
        %v871 = vmul.f32 %v860, %v869
        %s872 = scalar_lea.vmem %s6, 8
        %v873 = vld [vmem:[%s872] sm:$0xff]
        %v875 = vsel %vm716, %v873, 0
        %877 = vmatprep.subr.mxu0 0.0
        %878 = vmatpush1.msra.mxu0 0.0
        %879 = vmatprep.subr.mxu0 0.0
        %880 = vmatpush1.msra.mxu0 0.0
        %881 = vmatprep.subr.mxu0 0.0
        %882 = vmatpush1.msra.mxu0 0.0
        %883 = vmatprep.subr.mxu0 0.0
        %884 = vmatpush1.msra.mxu0 0.0
        %885 = vmatprep.subr.mxu0 0.0
        %886 = vmatpush1.msra.mxu0 0.0
        %887 = vmatprep.subr.mxu0 0.0
        %888 = vmatpush1.msra.mxu0 0.0
        %889 = vmatprep.subr.mxu0 0.0
        %890 = vmatpush1.msra.mxu0 0.0
        %891 = vmatprep.subr.mxu0 0.0
        %892 = vmatpush1.msra.mxu0 0.0
        %893 = vmatprep.subr.mxu0 0.0
        %894 = vmatpush1.msra.mxu0 0.0
        %895 = vmatprep.subr.mxu0 0.0
        %896 = vmatpush1.msra.mxu0 0.0
        %897 = vmatprep.subr.mxu0 0.0
        %898 = vmatpush1.msra.mxu0 0.0
        %899 = vmatprep.subr.mxu0 0.0
        %900 = vmatpush1.msra.mxu0 0.0
        %901 = vmatprep.subr.mxu0 0.0
        %902 = vmatpush1.msra.mxu0 0.0
        %903 = vmatprep.subr.mxu0 0.0
        %904 = vmatpush1.msra.mxu0 0.0
        %905 = vmatprep.subr.mxu0 0.0
        %906 = vmatpush1.msra.mxu0 0.0
        %907 = vmatprep.subr.mxu0 %v871
        %908 = vmatpush1.msra.mxu0 %v870
        %909 = vmatprep.subr.mxu0 0.0
        %910 = vmatpush2.msra.mxu0 0.0
        %911 = vmatprep.subr.mxu0 0.0
        %912 = vmatpush2.msra.mxu0 0.0
        %913 = vmatprep.subr.mxu0 0.0
        %914 = vmatpush2.msra.mxu0 0.0
        %915 = vmatprep.subr.mxu0 0.0
        %916 = vmatpush2.msra.mxu0 0.0
        %917 = vmatprep.subr.mxu0 0.0
        %918 = vmatpush2.msra.mxu0 0.0
        %919 = vmatprep.subr.mxu0 0.0
        %920 = vmatpush2.msra.mxu0 0.0
        %921 = vmatprep.subr.mxu0 0.0
        %922 = vmatpush2.msra.mxu0 0.0
        %923 = vmatprep.subr.mxu0 0.0
        %924 = vmatpush2.msra.mxu0 0.0
        %925 = vmatprep.subr.mxu0 0.0
        %926 = vmatpush2.msra.mxu0 0.0
        %927 = vmatprep.subr.mxu0 0.0
        %928 = vmatpush2.msra.mxu0 0.0
        %929 = vmatprep.subr.mxu0 0.0
        %930 = vmatpush2.msra.mxu0 0.0
        %931 = vmatprep.subr.mxu0 0.0
        %932 = vmatpush2.msra.mxu0 0.0
        %933 = vmatprep.subr.mxu0 0.0
        %934 = vmatpush2.msra.mxu0 0.0
        %935 = vmatprep.subr.mxu0 0.0
        %936 = vmatpush2.msra.mxu0 0.0
        %937 = vmatprep.subr.mxu0 0.0
        %938 = vmatpush2.msra.mxu0 0.0
        %939 = vmatprep.subr.mxu0 0.0
        %940 = vmatpush2.msra.mxu0 0.0
        %941 = vmatprep.mubr.f32.mxu0 0.0
        %942 = vmatmul.mubr.f32.gmra.mxu0 %v875
        %v943 = vpop.f32.mrf.mxu0
        %v944 = vadd.f32 0.0, %v943
        %v945 = vpop.f32.mrf.mxu0
        %v946 = vadd.f32 0.0, %v945
        %947 = vdwg.mxu0
        %v949 = vsel %vm716, %v854, 0
        %951 = vmatprep.subr.mxu0 0.0
        %952 = vmatpush1.msra.mxu0 0.0
        %953 = vmatprep.subr.mxu0 0.0
        %954 = vmatpush1.msra.mxu0 0.0
        %955 = vmatprep.subr.mxu0 0.0
        %956 = vmatpush1.msra.mxu0 0.0
        %957 = vmatprep.subr.mxu0 0.0
        %958 = vmatpush1.msra.mxu0 0.0
        %959 = vmatprep.subr.mxu0 0.0
        %960 = vmatpush1.msra.mxu0 0.0
        %961 = vmatprep.subr.mxu0 0.0
        %962 = vmatpush1.msra.mxu0 0.0
        %963 = vmatprep.subr.mxu0 0.0
        %964 = vmatpush1.msra.mxu0 0.0
        %965 = vmatprep.subr.mxu0 0.0
        %966 = vmatpush1.msra.mxu0 0.0
        %967 = vmatprep.subr.mxu0 0.0
        %968 = vmatpush1.msra.mxu0 0.0
        %969 = vmatprep.subr.mxu0 0.0
        %970 = vmatpush1.msra.mxu0 0.0
        %971 = vmatprep.subr.mxu0 0.0
        %972 = vmatpush1.msra.mxu0 0.0
        %973 = vmatprep.subr.mxu0 0.0
        %974 = vmatpush1.msra.mxu0 0.0
        %975 = vmatprep.subr.mxu0 0.0
        %976 = vmatpush1.msra.mxu0 0.0
        %977 = vmatprep.subr.mxu0 0.0
        %978 = vmatpush1.msra.mxu0 0.0
        %979 = vmatprep.subr.mxu0 0.0
        %980 = vmatpush1.msra.mxu0 0.0
        %981 = vmatprep.subr.mxu0 %v853
        %982 = vmatpush1.msra.mxu0 %v852
        %983 = vmatprep.subr.mxu0 0.0
        %984 = vmatpush2.msra.mxu0 0.0
        %985 = vmatprep.subr.mxu0 0.0
        %986 = vmatpush2.msra.mxu0 0.0
        %987 = vmatprep.subr.mxu0 0.0
        %988 = vmatpush2.msra.mxu0 0.0
        %989 = vmatprep.subr.mxu0 0.0
        %990 = vmatpush2.msra.mxu0 0.0
        %991 = vmatprep.subr.mxu0 0.0
        %992 = vmatpush2.msra.mxu0 0.0
        %993 = vmatprep.subr.mxu0 0.0
        %994 = vmatpush2.msra.mxu0 0.0
        %995 = vmatprep.subr.mxu0 0.0
        %996 = vmatpush2.msra.mxu0 0.0
        %997 = vmatprep.subr.mxu0 0.0
        %998 = vmatpush2.msra.mxu0 0.0
        %999 = vmatprep.subr.mxu0 0.0
        %1000 = vmatpush2.msra.mxu0 0.0
        %1001 = vmatprep.subr.mxu0 0.0
        %1002 = vmatpush2.msra.mxu0 0.0
        %1003 = vmatprep.subr.mxu0 0.0
        %1004 = vmatpush2.msra.mxu0 0.0
        %1005 = vmatprep.subr.mxu0 0.0
        %1006 = vmatpush2.msra.mxu0 0.0
        %1007 = vmatprep.subr.mxu0 0.0
        %1008 = vmatpush2.msra.mxu0 0.0
        %1009 = vmatprep.subr.mxu0 0.0
        %1010 = vmatpush2.msra.mxu0 0.0
        %1011 = vmatprep.subr.mxu0 0.0
        %1012 = vmatpush2.msra.mxu0 0.0
        %1013 = vmatprep.subr.mxu0 0.0
        %1014 = vmatpush2.msra.mxu0 0.0
        %1015 = vmatprep.mubr.f32.mxu0 0.0
        %1016 = vmatmul.mubr.f32.gmra.mxu0 %v949
        %v1017 = vpop.f32.mrf.mxu0
        %v1018 = vadd.f32 %v944, %v1017
        %v1019 = vpop.f32.mrf.mxu0
        %v1020 = vadd.f32 %v946, %v1019
        %1021 = vdwg.mxu0
        %1022 = vrot.lane.b32.xlu0 %v829, 15
        %v1023 = vpop.permute.xlu0 %1022
        %1024 = vrot.lane.b32.xlu0 %v830, 15
        %v1025 = vpop.permute.xlu0 %1024
        %vm1026 = vcmp.lt.s32.totalorder %v840, 15
        %v1027 = vsel %vm1026, %v1023, %v1025
        %v1028 = vsel %vm1026, %v1025, %v1023
        %v1029 = vlaneseq
        %v1030 = vshrl.u32 %v1029, 7
        %v1031 = vsub.s32 2, %v1030
        %v1032 = vrot.slane %v831, %v1031
        %v1033 = vlaneseq
        %v1034 = vshrl.u32 %v1033, 7
        %v1035 = vsub.s32 2, %v1034
        %v1036 = vrot.slane %v832, %v1035
        %v1037 = vmul.f32 %v1028, %v1032
        %v1038 = vmul.f32 %v1027, %v1036
        %s1039 = scalar_lea.vmem %s6, 16
        %v1040 = vld [vmem:[%s1039] sm:$0xff]
        %v1042 = vsel %vm716, %v1040, 0
        %1044 = vmatprep.subr.mxu0 0.0
        %1045 = vmatpush1.msra.mxu0 0.0
        %1046 = vmatprep.subr.mxu0 0.0
        %1047 = vmatpush1.msra.mxu0 0.0
        %1048 = vmatprep.subr.mxu0 0.0
        %1049 = vmatpush1.msra.mxu0 0.0
        %1050 = vmatprep.subr.mxu0 0.0
        %1051 = vmatpush1.msra.mxu0 0.0
        %1052 = vmatprep.subr.mxu0 0.0
        %1053 = vmatpush1.msra.mxu0 0.0
        %1054 = vmatprep.subr.mxu0 0.0
        %1055 = vmatpush1.msra.mxu0 0.0
        %1056 = vmatprep.subr.mxu0 0.0
        %1057 = vmatpush1.msra.mxu0 0.0
        %1058 = vmatprep.subr.mxu0 0.0
        %1059 = vmatpush1.msra.mxu0 0.0
        %1060 = vmatprep.subr.mxu0 0.0
        %1061 = vmatpush1.msra.mxu0 0.0
        %1062 = vmatprep.subr.mxu0 0.0
        %1063 = vmatpush1.msra.mxu0 0.0
        %1064 = vmatprep.subr.mxu0 0.0
        %1065 = vmatpush1.msra.mxu0 0.0
        %1066 = vmatprep.subr.mxu0 0.0
        %1067 = vmatpush1.msra.mxu0 0.0
        %1068 = vmatprep.subr.mxu0 0.0
        %1069 = vmatpush1.msra.mxu0 0.0
        %1070 = vmatprep.subr.mxu0 0.0
        %1071 = vmatpush1.msra.mxu0 0.0
        %1072 = vmatprep.subr.mxu0 0.0
        %1073 = vmatpush1.msra.mxu0 0.0
        %1074 = vmatprep.subr.mxu0 %v1038
        %1075 = vmatpush1.msra.mxu0 %v1037
        %1076 = vmatprep.subr.mxu0 0.0
        %1077 = vmatpush2.msra.mxu0 0.0
        %1078 = vmatprep.subr.mxu0 0.0
        %1079 = vmatpush2.msra.mxu0 0.0
        %1080 = vmatprep.subr.mxu0 0.0
        %1081 = vmatpush2.msra.mxu0 0.0
        %1082 = vmatprep.subr.mxu0 0.0
        %1083 = vmatpush2.msra.mxu0 0.0
        %1084 = vmatprep.subr.mxu0 0.0
        %1085 = vmatpush2.msra.mxu0 0.0
        %1086 = vmatprep.subr.mxu0 0.0
        %1087 = vmatpush2.msra.mxu0 0.0
        %1088 = vmatprep.subr.mxu0 0.0
        %1089 = vmatpush2.msra.mxu0 0.0
        %1090 = vmatprep.subr.mxu0 0.0
        %1091 = vmatpush2.msra.mxu0 0.0
        %1092 = vmatprep.subr.mxu0 0.0
        %1093 = vmatpush2.msra.mxu0 0.0
        %1094 = vmatprep.subr.mxu0 0.0
        %1095 = vmatpush2.msra.mxu0 0.0
        %1096 = vmatprep.subr.mxu0 0.0
        %1097 = vmatpush2.msra.mxu0 0.0
        %1098 = vmatprep.subr.mxu0 0.0
        %1099 = vmatpush2.msra.mxu0 0.0
        %1100 = vmatprep.subr.mxu0 0.0
        %1101 = vmatpush2.msra.mxu0 0.0
        %1102 = vmatprep.subr.mxu0 0.0
        %1103 = vmatpush2.msra.mxu0 0.0
        %1104 = vmatprep.subr.mxu0 0.0
        %1105 = vmatpush2.msra.mxu0 0.0
        %1106 = vmatprep.subr.mxu0 0.0
        %1107 = vmatpush2.msra.mxu0 0.0
        %1108 = vmatprep.mubr.f32.mxu0 0.0
        %1109 = vmatmul.mubr.f32.gmra.mxu0 %v1042
        %v1110 = vpop.f32.mrf.mxu0
        %v1111 = vadd.f32 0.0, %v1110
        %v1112 = vpop.f32.mrf.mxu0
        %v1113 = vadd.f32 0.0, %v1112
        %1114 = vdwg.mxu0
        %v1115 = vadd.f32 %v1018, %v1111
        %v1116 = vadd.f32 %v1020, %v1113
        %1117 = vrot.lane.b32.xlu0 %v829, 1
        %v1118 = vpop.permute.xlu0 %1117
        %1119 = vrot.lane.b32.xlu0 %v830, 1
        %v1120 = vpop.permute.xlu0 %1119
        %vm1121 = vcmp.lt.s32.totalorder %v840, 1
        %v1122 = vsel %vm1121, %v1118, %v1120
        %v1123 = vsel %vm1121, %v1120, %v1118
        %v1124 = vlaneseq
        %v1125 = vshrl.u32 %v1124, 7
        %v1126 = vsub.s32 3, %v1125
        %v1127 = vrot.slane %v831, %v1126
        %v1128 = vlaneseq
        %v1129 = vshrl.u32 %v1128, 7
        %v1130 = vsub.s32 3, %v1129
        %v1131 = vrot.slane %v832, %v1130
        %v1132 = vmul.f32 %v1123, %v1127
        %v1133 = vmul.f32 %v1122, %v1131
        %s1134 = scalar_lea.vmem %s6, 24
        %v1135 = vld [vmem:[%s1134] sm:$0xff]
        %v1137 = vsel %vm716, %v1135, 0
        %1139 = vmatprep.subr.mxu0 0.0
        %1140 = vmatpush1.msra.mxu0 0.0
        %1141 = vmatprep.subr.mxu0 0.0
        %1142 = vmatpush1.msra.mxu0 0.0
        %1143 = vmatprep.subr.mxu0 0.0
        %1144 = vmatpush1.msra.mxu0 0.0
        %1145 = vmatprep.subr.mxu0 0.0
        %1146 = vmatpush1.msra.mxu0 0.0
        %1147 = vmatprep.subr.mxu0 0.0
        %1148 = vmatpush1.msra.mxu0 0.0
        %1149 = vmatprep.subr.mxu0 0.0
        %1150 = vmatpush1.msra.mxu0 0.0
        %1151 = vmatprep.subr.mxu0 0.0
        %1152 = vmatpush1.msra.mxu0 0.0
        %1153 = vmatprep.subr.mxu0 0.0
        %1154 = vmatpush1.msra.mxu0 0.0
        %1155 = vmatprep.subr.mxu0 0.0
        %1156 = vmatpush1.msra.mxu0 0.0
        %1157 = vmatprep.subr.mxu0 0.0
        %1158 = vmatpush1.msra.mxu0 0.0
        %1159 = vmatprep.subr.mxu0 0.0
        %1160 = vmatpush1.msra.mxu0 0.0
        %1161 = vmatprep.subr.mxu0 0.0
        %1162 = vmatpush1.msra.mxu0 0.0
        %1163 = vmatprep.subr.mxu0 0.0
        %1164 = vmatpush1.msra.mxu0 0.0
        %1165 = vmatprep.subr.mxu0 0.0
        %1166 = vmatpush1.msra.mxu0 0.0
        %1167 = vmatprep.subr.mxu0 0.0
        %1168 = vmatpush1.msra.mxu0 0.0
        %1169 = vmatprep.subr.mxu0 %v1133
        %1170 = vmatpush1.msra.mxu0 %v1132
        %1171 = vmatprep.subr.mxu0 0.0
        %1172 = vmatpush2.msra.mxu0 0.0
        %1173 = vmatprep.subr.mxu0 0.0
        %1174 = vmatpush2.msra.mxu0 0.0
        %1175 = vmatprep.subr.mxu0 0.0
        %1176 = vmatpush2.msra.mxu0 0.0
        %1177 = vmatprep.subr.mxu0 0.0
        %1178 = vmatpush2.msra.mxu0 0.0
        %1179 = vmatprep.subr.mxu0 0.0
        %1180 = vmatpush2.msra.mxu0 0.0
        %1181 = vmatprep.subr.mxu0 0.0
        %1182 = vmatpush2.msra.mxu0 0.0
        %1183 = vmatprep.subr.mxu0 0.0
        %1184 = vmatpush2.msra.mxu0 0.0
        %1185 = vmatprep.subr.mxu0 0.0
        %1186 = vmatpush2.msra.mxu0 0.0
        %1187 = vmatprep.subr.mxu0 0.0
        %1188 = vmatpush2.msra.mxu0 0.0
        %1189 = vmatprep.subr.mxu0 0.0
        %1190 = vmatpush2.msra.mxu0 0.0
        %1191 = vmatprep.subr.mxu0 0.0
        %1192 = vmatpush2.msra.mxu0 0.0
        %1193 = vmatprep.subr.mxu0 0.0
        %1194 = vmatpush2.msra.mxu0 0.0
        %1195 = vmatprep.subr.mxu0 0.0
        %1196 = vmatpush2.msra.mxu0 0.0
        %1197 = vmatprep.subr.mxu0 0.0
        %1198 = vmatpush2.msra.mxu0 0.0
        %1199 = vmatprep.subr.mxu0 0.0
        %1200 = vmatpush2.msra.mxu0 0.0
        %1201 = vmatprep.subr.mxu0 0.0
        %1202 = vmatpush2.msra.mxu0 0.0
        %1203 = vmatprep.mubr.f32.mxu0 0.0
        %1204 = vmatmul.mubr.f32.gmra.mxu0 %v1137
        %v1205 = vpop.f32.mrf.mxu0
        %v1206 = vadd.f32 0.0, %v1205
        %v1207 = vpop.f32.mrf.mxu0
        %v1208 = vadd.f32 0.0, %v1207
        %1209 = vdwg.mxu0
        %v1210 = vadd.f32 %v1115, %v1206
        %v1211 = vadd.f32 %v1116, %v1208
        %s1212 = scalar_lea.vmem %s6, 32
        %v1213 = vld [vmem:[%s1212] sm:$0xff]
        %v1215 = vsel %vm716, %v1213, 0
        %1217 = vmatprep.subr.mxu0 0.0
        %1218 = vmatpush1.msra.mxu0 0.0
        %1219 = vmatprep.subr.mxu0 0.0
        %1220 = vmatpush1.msra.mxu0 0.0
        %1221 = vmatprep.subr.mxu0 0.0
        %1222 = vmatpush1.msra.mxu0 0.0
        %1223 = vmatprep.subr.mxu0 0.0
        %1224 = vmatpush1.msra.mxu0 0.0
        %1225 = vmatprep.subr.mxu0 0.0
        %1226 = vmatpush1.msra.mxu0 0.0
        %1227 = vmatprep.subr.mxu0 0.0
        %1228 = vmatpush1.msra.mxu0 0.0
        %1229 = vmatprep.subr.mxu0 0.0
        %1230 = vmatpush1.msra.mxu0 0.0
        %1231 = vmatprep.subr.mxu0 0.0
        %1232 = vmatpush1.msra.mxu0 0.0
        %1233 = vmatprep.subr.mxu0 0.0
        %1234 = vmatpush1.msra.mxu0 0.0
        %1235 = vmatprep.subr.mxu0 0.0
        %1236 = vmatpush1.msra.mxu0 0.0
        %1237 = vmatprep.subr.mxu0 0.0
        %1238 = vmatpush1.msra.mxu0 0.0
        %1239 = vmatprep.subr.mxu0 0.0
        %1240 = vmatpush1.msra.mxu0 0.0
        %1241 = vmatprep.subr.mxu0 0.0
        %1242 = vmatpush1.msra.mxu0 0.0
        %1243 = vmatprep.subr.mxu0 0.0
        %1244 = vmatpush1.msra.mxu0 0.0
        %1245 = vmatprep.subr.mxu0 0.0
        %1246 = vmatpush1.msra.mxu0 0.0
        %1247 = vmatprep.subr.mxu0 %v830
        %1248 = vmatpush1.msra.mxu0 %v829
        %1249 = vmatprep.subr.mxu0 0.0
        %1250 = vmatpush2.msra.mxu0 0.0
        %1251 = vmatprep.subr.mxu0 0.0
        %1252 = vmatpush2.msra.mxu0 0.0
        %1253 = vmatprep.subr.mxu0 0.0
        %1254 = vmatpush2.msra.mxu0 0.0
        %1255 = vmatprep.subr.mxu0 0.0
        %1256 = vmatpush2.msra.mxu0 0.0
        %1257 = vmatprep.subr.mxu0 0.0
        %1258 = vmatpush2.msra.mxu0 0.0
        %1259 = vmatprep.subr.mxu0 0.0
        %1260 = vmatpush2.msra.mxu0 0.0
        %1261 = vmatprep.subr.mxu0 0.0
        %1262 = vmatpush2.msra.mxu0 0.0
        %1263 = vmatprep.subr.mxu0 0.0
        %1264 = vmatpush2.msra.mxu0 0.0
        %1265 = vmatprep.subr.mxu0 0.0
        %1266 = vmatpush2.msra.mxu0 0.0
        %1267 = vmatprep.subr.mxu0 0.0
        %1268 = vmatpush2.msra.mxu0 0.0
        %1269 = vmatprep.subr.mxu0 0.0
        %1270 = vmatpush2.msra.mxu0 0.0
        %1271 = vmatprep.subr.mxu0 0.0
        %1272 = vmatpush2.msra.mxu0 0.0
        %1273 = vmatprep.subr.mxu0 0.0
        %1274 = vmatpush2.msra.mxu0 0.0
        %1275 = vmatprep.subr.mxu0 0.0
        %1276 = vmatpush2.msra.mxu0 0.0
        %1277 = vmatprep.subr.mxu0 0.0
        %1278 = vmatpush2.msra.mxu0 0.0
        %1279 = vmatprep.subr.mxu0 0.0
        %1280 = vmatpush2.msra.mxu0 0.0
        %1281 = vmatprep.mubr.f32.mxu0 0.0
        %1282 = vmatmul.mubr.f32.gmra.mxu0 %v1215
        %v1283 = vpop.f32.mrf.mxu0
        %v1284 = vadd.f32 0.0, %v1283
        %v1285 = vpop.f32.mrf.mxu0
        %v1286 = vadd.f32 0.0, %v1285
        %1287 = vdwg.mxu0
        %v1288 = vadd.f32 %v1210, %v1284
        %v1289 = vadd.f32 %v1211, %v1286
        %1290 = vrot.lane.b32.xlu0 %v829, 127
        %v1291 = vpop.permute.xlu0 %1290
        %1292 = vrot.lane.b32.xlu0 %v830, 127
        %v1293 = vpop.permute.xlu0 %1292
        %vm1294 = vcmp.lt.s32.totalorder %v840, 127
        %v1295 = vsel %vm1294, %v1291, %v1293
        %v1296 = vsel %vm1294, %v1293, %v1291
        %v1297 = vlaneseq
        %v1298 = vshrl.u32 %v1297, 7
        %v1299 = vsub.s32 5, %v1298
        %v1300 = vrot.slane %v831, %v1299
        %v1301 = vlaneseq
        %v1302 = vshrl.u32 %v1301, 7
        %v1303 = vsub.s32 5, %v1302
        %v1304 = vrot.slane %v832, %v1303
        %v1305 = vmul.f32 %v1295, %v1300
        %v1306 = vmul.f32 %v1296, %v1304
        %s1307 = scalar_lea.vmem %s6, 40
        %v1308 = vld [vmem:[%s1307] sm:$0xff]
        %v1310 = vsel %vm716, %v1308, 0
        %1312 = vmatprep.subr.mxu0 0.0
        %1313 = vmatpush1.msra.mxu0 0.0
        %1314 = vmatprep.subr.mxu0 0.0
        %1315 = vmatpush1.msra.mxu0 0.0
        %1316 = vmatprep.subr.mxu0 0.0
        %1317 = vmatpush1.msra.mxu0 0.0
        %1318 = vmatprep.subr.mxu0 0.0
        %1319 = vmatpush1.msra.mxu0 0.0
        %1320 = vmatprep.subr.mxu0 0.0
        %1321 = vmatpush1.msra.mxu0 0.0
        %1322 = vmatprep.subr.mxu0 0.0
        %1323 = vmatpush1.msra.mxu0 0.0
        %1324 = vmatprep.subr.mxu0 0.0
        %1325 = vmatpush1.msra.mxu0 0.0
        %1326 = vmatprep.subr.mxu0 0.0
        %1327 = vmatpush1.msra.mxu0 0.0
        %1328 = vmatprep.subr.mxu0 0.0
        %1329 = vmatpush1.msra.mxu0 0.0
        %1330 = vmatprep.subr.mxu0 0.0
        %1331 = vmatpush1.msra.mxu0 0.0
        %1332 = vmatprep.subr.mxu0 0.0
        %1333 = vmatpush1.msra.mxu0 0.0
        %1334 = vmatprep.subr.mxu0 0.0
        %1335 = vmatpush1.msra.mxu0 0.0
        %1336 = vmatprep.subr.mxu0 0.0
        %1337 = vmatpush1.msra.mxu0 0.0
        %1338 = vmatprep.subr.mxu0 0.0
        %1339 = vmatpush1.msra.mxu0 0.0
        %1340 = vmatprep.subr.mxu0 0.0
        %1341 = vmatpush1.msra.mxu0 0.0
        %1342 = vmatprep.subr.mxu0 %v1306
        %1343 = vmatpush1.msra.mxu0 %v1305
        %1344 = vmatprep.subr.mxu0 0.0
        %1345 = vmatpush2.msra.mxu0 0.0
        %1346 = vmatprep.subr.mxu0 0.0
        %1347 = vmatpush2.msra.mxu0 0.0
        %1348 = vmatprep.subr.mxu0 0.0
        %1349 = vmatpush2.msra.mxu0 0.0
        %1350 = vmatprep.subr.mxu0 0.0
        %1351 = vmatpush2.msra.mxu0 0.0
        %1352 = vmatprep.subr.mxu0 0.0
        %1353 = vmatpush2.msra.mxu0 0.0
        %1354 = vmatprep.subr.mxu0 0.0
        %1355 = vmatpush2.msra.mxu0 0.0
        %1356 = vmatprep.subr.mxu0 0.0
        %1357 = vmatpush2.msra.mxu0 0.0
        %1358 = vmatprep.subr.mxu0 0.0
        %1359 = vmatpush2.msra.mxu0 0.0
        %1360 = vmatprep.subr.mxu0 0.0
        %1361 = vmatpush2.msra.mxu0 0.0
        %1362 = vmatprep.subr.mxu0 0.0
        %1363 = vmatpush2.msra.mxu0 0.0
        %1364 = vmatprep.subr.mxu0 0.0
        %1365 = vmatpush2.msra.mxu0 0.0
        %1366 = vmatprep.subr.mxu0 0.0
        %1367 = vmatpush2.msra.mxu0 0.0
        %1368 = vmatprep.subr.mxu0 0.0
        %1369 = vmatpush2.msra.mxu0 0.0
        %1370 = vmatprep.subr.mxu0 0.0
        %1371 = vmatpush2.msra.mxu0 0.0
        %1372 = vmatprep.subr.mxu0 0.0
        %1373 = vmatpush2.msra.mxu0 0.0
        %1374 = vmatprep.subr.mxu0 0.0
        %1375 = vmatpush2.msra.mxu0 0.0
        %1376 = vmatprep.mubr.f32.mxu0 0.0
        %1377 = vmatmul.mubr.f32.gmra.mxu0 %v1310
        %v1378 = vpop.f32.mrf.mxu0
        %v1379 = vadd.f32 0.0, %v1378
        %v1380 = vpop.f32.mrf.mxu0
        %v1381 = vadd.f32 0.0, %v1380
        %1382 = vdwg.mxu0
        %v1383 = vadd.f32 %v1288, %v1379
        %v1384 = vadd.f32 %v1289, %v1381
        %1385 = vrot.lane.b32.xlu0 %v829, 113
        %v1386 = vpop.permute.xlu0 %1385
        %1387 = vrot.lane.b32.xlu0 %v830, 113
        %v1388 = vpop.permute.xlu0 %1387
        %vm1389 = vcmp.lt.s32.totalorder %v840, 113
        %v1390 = vsel %vm1389, %v1386, %v1388
        %v1391 = vsel %vm1389, %v1388, %v1386
        %v1392 = vlaneseq
        %v1393 = vshrl.u32 %v1392, 7
        %v1394 = vsub.s32 6, %v1393
        %v1395 = vrot.slane %v831, %v1394
        %v1396 = vlaneseq
        %v1397 = vshrl.u32 %v1396, 7
        %v1398 = vsub.s32 6, %v1397
        %v1399 = vrot.slane %v832, %v1398
        %v1400 = vmul.f32 %v1390, %v1395
        %v1401 = vmul.f32 %v1391, %v1399
        %s1402 = scalar_lea.vmem %s6, 48
        %v1403 = vld [vmem:[%s1402] sm:$0xff]
        %v1405 = vsel %vm716, %v1403, 0
        %1407 = vmatprep.subr.mxu0 0.0
        %1408 = vmatpush1.msra.mxu0 0.0
        %1409 = vmatprep.subr.mxu0 0.0
        %1410 = vmatpush1.msra.mxu0 0.0
        %1411 = vmatprep.subr.mxu0 0.0
        %1412 = vmatpush1.msra.mxu0 0.0
        %1413 = vmatprep.subr.mxu0 0.0
        %1414 = vmatpush1.msra.mxu0 0.0
        %1415 = vmatprep.subr.mxu0 0.0
        %1416 = vmatpush1.msra.mxu0 0.0
        %1417 = vmatprep.subr.mxu0 0.0
        %1418 = vmatpush1.msra.mxu0 0.0
        %1419 = vmatprep.subr.mxu0 0.0
        %1420 = vmatpush1.msra.mxu0 0.0
        %1421 = vmatprep.subr.mxu0 0.0
        %1422 = vmatpush1.msra.mxu0 0.0
        %1423 = vmatprep.subr.mxu0 0.0
        %1424 = vmatpush1.msra.mxu0 0.0
        %1425 = vmatprep.subr.mxu0 0.0
        %1426 = vmatpush1.msra.mxu0 0.0
        %1427 = vmatprep.subr.mxu0 0.0
        %1428 = vmatpush1.msra.mxu0 0.0
        %1429 = vmatprep.subr.mxu0 0.0
        %1430 = vmatpush1.msra.mxu0 0.0
        %1431 = vmatprep.subr.mxu0 0.0
        %1432 = vmatpush1.msra.mxu0 0.0
        %1433 = vmatprep.subr.mxu0 0.0
        %1434 = vmatpush1.msra.mxu0 0.0
        %1435 = vmatprep.subr.mxu0 0.0
        %1436 = vmatpush1.msra.mxu0 0.0
        %1437 = vmatprep.subr.mxu0 %v1401
        %1438 = vmatpush1.msra.mxu0 %v1400
        %1439 = vmatprep.subr.mxu0 0.0
        %1440 = vmatpush2.msra.mxu0 0.0
        %1441 = vmatprep.subr.mxu0 0.0
        %1442 = vmatpush2.msra.mxu0 0.0
        %1443 = vmatprep.subr.mxu0 0.0
        %1444 = vmatpush2.msra.mxu0 0.0
        %1445 = vmatprep.subr.mxu0 0.0
        %1446 = vmatpush2.msra.mxu0 0.0
        %1447 = vmatprep.subr.mxu0 0.0
        %1448 = vmatpush2.msra.mxu0 0.0
        %1449 = vmatprep.subr.mxu0 0.0
        %1450 = vmatpush2.msra.mxu0 0.0
        %1451 = vmatprep.subr.mxu0 0.0
        %1452 = vmatpush2.msra.mxu0 0.0
        %1453 = vmatprep.subr.mxu0 0.0
        %1454 = vmatpush2.msra.mxu0 0.0
        %1455 = vmatprep.subr.mxu0 0.0
        %1456 = vmatpush2.msra.mxu0 0.0
        %1457 = vmatprep.subr.mxu0 0.0
        %1458 = vmatpush2.msra.mxu0 0.0
        %1459 = vmatprep.subr.mxu0 0.0
        %1460 = vmatpush2.msra.mxu0 0.0
        %1461 = vmatprep.subr.mxu0 0.0
        %1462 = vmatpush2.msra.mxu0 0.0
        %1463 = vmatprep.subr.mxu0 0.0
        %1464 = vmatpush2.msra.mxu0 0.0
        %1465 = vmatprep.subr.mxu0 0.0
        %1466 = vmatpush2.msra.mxu0 0.0
        %1467 = vmatprep.subr.mxu0 0.0
        %1468 = vmatpush2.msra.mxu0 0.0
        %1469 = vmatprep.subr.mxu0 0.0
        %1470 = vmatpush2.msra.mxu0 0.0
        %1471 = vmatprep.mubr.f32.mxu0 0.0
        %1472 = vmatmul.mubr.f32.gmra.mxu0 %v1405
        %v1473 = vpop.f32.mrf.mxu0
        %v1474 = vadd.f32 0.0, %v1473
        %v1475 = vpop.f32.mrf.mxu0
        %v1476 = vadd.f32 0.0, %v1475
        %1477 = vdwg.mxu0
        %v1478 = vadd.f32 %v1383, %v1474
        %v1479 = vadd.f32 %v1384, %v1476
        %1480 = vrot.lane.b32.xlu0 %v829, 112
        %v1481 = vpop.permute.xlu0 %1480
        %1482 = vrot.lane.b32.xlu0 %v830, 112
        %v1483 = vpop.permute.xlu0 %1482
        %vm1484 = vcmp.lt.s32.totalorder %v840, 112
        %v1485 = vsel %vm1484, %v1481, %v1483
        %v1486 = vsel %vm1484, %v1483, %v1481
        %v1487 = vlaneseq
        %v1488 = vshrl.u32 %v1487, 7
        %v1489 = vsub.s32 7, %v1488
        %v1490 = vrot.slane %v831, %v1489
        %v1491 = vlaneseq
        %v1492 = vshrl.u32 %v1491, 7
        %v1493 = vsub.s32 7, %v1492
        %v1494 = vrot.slane %v832, %v1493
        %v1495 = vmul.f32 %v1485, %v1490
        %v1496 = vmul.f32 %v1486, %v1494
        %s1497 = scalar_lea.vmem %s6, 56
        %v1498 = vld [vmem:[%s1497] sm:$0xff]
        %v1500 = vsel %vm716, %v1498, 0
        %1502 = vmatprep.subr.mxu0 0.0
        %1503 = vmatpush1.msra.mxu0 0.0
        %1504 = vmatprep.subr.mxu0 0.0
        %1505 = vmatpush1.msra.mxu0 0.0
        %1506 = vmatprep.subr.mxu0 0.0
        %1507 = vmatpush1.msra.mxu0 0.0
        %1508 = vmatprep.subr.mxu0 0.0
        %1509 = vmatpush1.msra.mxu0 0.0
        %1510 = vmatprep.subr.mxu0 0.0
        %1511 = vmatpush1.msra.mxu0 0.0
        %1512 = vmatprep.subr.mxu0 0.0
        %1513 = vmatpush1.msra.mxu0 0.0
        %1514 = vmatprep.subr.mxu0 0.0
        %1515 = vmatpush1.msra.mxu0 0.0
        %1516 = vmatprep.subr.mxu0 0.0
        %1517 = vmatpush1.msra.mxu0 0.0
        %1518 = vmatprep.subr.mxu0 0.0
        %1519 = vmatpush1.msra.mxu0 0.0
        %1520 = vmatprep.subr.mxu0 0.0
        %1521 = vmatpush1.msra.mxu0 0.0
        %1522 = vmatprep.subr.mxu0 0.0
        %1523 = vmatpush1.msra.mxu0 0.0
        %1524 = vmatprep.subr.mxu0 0.0
        %1525 = vmatpush1.msra.mxu0 0.0
        %1526 = vmatprep.subr.mxu0 0.0
        %1527 = vmatpush1.msra.mxu0 0.0
        %1528 = vmatprep.subr.mxu0 0.0
        %1529 = vmatpush1.msra.mxu0 0.0
        %1530 = vmatprep.subr.mxu0 0.0
        %1531 = vmatpush1.msra.mxu0 0.0
        %1532 = vmatprep.subr.mxu0 %v1496
        %1533 = vmatpush1.msra.mxu0 %v1495
        %1534 = vmatprep.subr.mxu0 0.0
        %1535 = vmatpush2.msra.mxu0 0.0
        %1536 = vmatprep.subr.mxu0 0.0
        %1537 = vmatpush2.msra.mxu0 0.0
        %1538 = vmatprep.subr.mxu0 0.0
        %1539 = vmatpush2.msra.mxu0 0.0
        %1540 = vmatprep.subr.mxu0 0.0
        %1541 = vmatpush2.msra.mxu0 0.0
        %1542 = vmatprep.subr.mxu0 0.0
        %1543 = vmatpush2.msra.mxu0 0.0
        %1544 = vmatprep.subr.mxu0 0.0
        %1545 = vmatpush2.msra.mxu0 0.0
        %1546 = vmatprep.subr.mxu0 0.0
        %1547 = vmatpush2.msra.mxu0 0.0
        %1548 = vmatprep.subr.mxu0 0.0
        %1549 = vmatpush2.msra.mxu0 0.0
        %1550 = vmatprep.subr.mxu0 0.0
        %1551 = vmatpush2.msra.mxu0 0.0
        %1552 = vmatprep.subr.mxu0 0.0
        %1553 = vmatpush2.msra.mxu0 0.0
        %1554 = vmatprep.subr.mxu0 0.0
        %1555 = vmatpush2.msra.mxu0 0.0
        %1556 = vmatprep.subr.mxu0 0.0
        %1557 = vmatpush2.msra.mxu0 0.0
        %1558 = vmatprep.subr.mxu0 0.0
        %1559 = vmatpush2.msra.mxu0 0.0
        %1560 = vmatprep.subr.mxu0 0.0
        %1561 = vmatpush2.msra.mxu0 0.0
        %1562 = vmatprep.subr.mxu0 0.0
        %1563 = vmatpush2.msra.mxu0 0.0
        %1564 = vmatprep.subr.mxu0 0.0
        %1565 = vmatpush2.msra.mxu0 0.0
        %1566 = vmatprep.mubr.f32.mxu0 0.0
        %1567 = vmatmul.mubr.f32.gmra.mxu0 %v1500
        %v1568 = vpop.f32.mrf.mxu0
        %v1569 = vadd.f32 0.0, %v1568
        %v1570 = vpop.f32.mrf.mxu0
        %v1571 = vadd.f32 0.0, %v1570
        %1572 = vdwg.mxu0
        %v1573 = vadd.f32 %v1478, %v1569
        %v1574 = vadd.f32 %v1479, %v1571
        %1575 = vrot.lane.b32.xlu0 %v829, 111
        %v1576 = vpop.permute.xlu0 %1575
        %1577 = vrot.lane.b32.xlu0 %v830, 111
        %v1578 = vpop.permute.xlu0 %1577
        %vm1579 = vcmp.lt.s32.totalorder %v840, 111
        %v1580 = vsel %vm1579, %v1576, %v1578
        %v1581 = vsel %vm1579, %v1578, %v1576
        %v1582 = vlaneseq
        %v1583 = vshrl.u32 %v1582, 7
        %v1584 = vsub.s32 0, %v1583
        %v1585 = vrot.slane %v833, %v1584
        %v1586 = vlaneseq
        %v1587 = vshrl.u32 %v1586, 7
        %v1588 = vsub.s32 0, %v1587
        %v1589 = vrot.slane %v834, %v1588
        %v1590 = vmul.f32 %v1580, %v1585
        %v1591 = vmul.f32 %v1581, %v1589
        %s1592 = scalar_lea.vmem %s6, 64
        %v1593 = vld [vmem:[%s1592] sm:$0xff]
        %v1595 = vsel %vm716, %v1593, 0
        %1597 = vmatprep.subr.mxu0 0.0
        %1598 = vmatpush1.msra.mxu0 0.0
        %1599 = vmatprep.subr.mxu0 0.0
        %1600 = vmatpush1.msra.mxu0 0.0
        %1601 = vmatprep.subr.mxu0 0.0
        %1602 = vmatpush1.msra.mxu0 0.0
        %1603 = vmatprep.subr.mxu0 0.0
        %1604 = vmatpush1.msra.mxu0 0.0
        %1605 = vmatprep.subr.mxu0 0.0
        %1606 = vmatpush1.msra.mxu0 0.0
        %1607 = vmatprep.subr.mxu0 0.0
        %1608 = vmatpush1.msra.mxu0 0.0
        %1609 = vmatprep.subr.mxu0 0.0
        %1610 = vmatpush1.msra.mxu0 0.0
        %1611 = vmatprep.subr.mxu0 0.0
        %1612 = vmatpush1.msra.mxu0 0.0
        %1613 = vmatprep.subr.mxu0 0.0
        %1614 = vmatpush1.msra.mxu0 0.0
        %1615 = vmatprep.subr.mxu0 0.0
        %1616 = vmatpush1.msra.mxu0 0.0
        %1617 = vmatprep.subr.mxu0 0.0
        %1618 = vmatpush1.msra.mxu0 0.0
        %1619 = vmatprep.subr.mxu0 0.0
        %1620 = vmatpush1.msra.mxu0 0.0
        %1621 = vmatprep.subr.mxu0 0.0
        %1622 = vmatpush1.msra.mxu0 0.0
        %1623 = vmatprep.subr.mxu0 0.0
        %1624 = vmatpush1.msra.mxu0 0.0
        %1625 = vmatprep.subr.mxu0 0.0
        %1626 = vmatpush1.msra.mxu0 0.0
        %1627 = vmatprep.subr.mxu0 %v1591
        %1628 = vmatpush1.msra.mxu0 %v1590
        %1629 = vmatprep.subr.mxu0 0.0
        %1630 = vmatpush2.msra.mxu0 0.0
        %1631 = vmatprep.subr.mxu0 0.0
        %1632 = vmatpush2.msra.mxu0 0.0
        %1633 = vmatprep.subr.mxu0 0.0
        %1634 = vmatpush2.msra.mxu0 0.0
        %1635 = vmatprep.subr.mxu0 0.0
        %1636 = vmatpush2.msra.mxu0 0.0
        %1637 = vmatprep.subr.mxu0 0.0
        %1638 = vmatpush2.msra.mxu0 0.0
        %1639 = vmatprep.subr.mxu0 0.0
        %1640 = vmatpush2.msra.mxu0 0.0
        %1641 = vmatprep.subr.mxu0 0.0
        %1642 = vmatpush2.msra.mxu0 0.0
        %1643 = vmatprep.subr.mxu0 0.0
        %1644 = vmatpush2.msra.mxu0 0.0
        %1645 = vmatprep.subr.mxu0 0.0
        %1646 = vmatpush2.msra.mxu0 0.0
        %1647 = vmatprep.subr.mxu0 0.0
        %1648 = vmatpush2.msra.mxu0 0.0
        %1649 = vmatprep.subr.mxu0 0.0
        %1650 = vmatpush2.msra.mxu0 0.0
        %1651 = vmatprep.subr.mxu0 0.0
        %1652 = vmatpush2.msra.mxu0 0.0
        %1653 = vmatprep.subr.mxu0 0.0
        %1654 = vmatpush2.msra.mxu0 0.0
        %1655 = vmatprep.subr.mxu0 0.0
        %1656 = vmatpush2.msra.mxu0 0.0
        %1657 = vmatprep.subr.mxu0 0.0
        %1658 = vmatpush2.msra.mxu0 0.0
        %1659 = vmatprep.subr.mxu0 0.0
        %1660 = vmatpush2.msra.mxu0 0.0
        %1661 = vmatprep.mubr.f32.mxu0 0.0
        %1662 = vmatmul.mubr.f32.gmra.mxu0 %v1595
        %v1663 = vpop.f32.mrf.mxu0
        %v1664 = vadd.f32 0.0, %v1663
        %v1665 = vpop.f32.mrf.mxu0
        %v1666 = vadd.f32 0.0, %v1665
        %1667 = vdwg.mxu0
        %v1668 = vadd.f32 %v1573, %v1664
        %v1669 = vadd.f32 %v1574, %v1666
        %v1670 = vld [vmem:[%s7] sm:$0xff]
        %v1671 = vld [vmem:[%s8] sm:$0xff]
        %v1672 = vld [vmem:[%s12] sm:$0xff]
        %v1673 = vadd.f32 %v1668, %v1669
        %1674 = vadd.xlane.f32.xlu0 %v1673
        %v1675 = vpop.xlane.xlu0 %1674
        %v1676 = vmul.f32 %v1668, %v1668
        %v1677 = vmul.f32 %v1669, %v1669
        %v1678 = vadd.f32 %v1676, %v1677
        %1679 = vadd.xlane.f32.xlu0 %v1678
        %v1680 = vpop.xlane.xlu0 %1679
        %v1681 = vsel %vm488, %v1675, %v1680
        %v1683 = vsel %vm716, %v1672, 0
        %1685 = vmatprep.subr.mxu0 0.0
        %1686 = vmatpush1.msra.mxu0 0.0
        %1687 = vmatprep.subr.mxu0 0.0
        %1688 = vmatpush1.msra.mxu0 0.0
        %1689 = vmatprep.subr.mxu0 0.0
        %1690 = vmatpush1.msra.mxu0 0.0
        %1691 = vmatprep.subr.mxu0 0.0
        %1692 = vmatpush1.msra.mxu0 0.0
        %1693 = vmatprep.subr.mxu0 0.0
        %1694 = vmatpush1.msra.mxu0 0.0
        %1695 = vmatprep.subr.mxu0 0.0
        %1696 = vmatpush1.msra.mxu0 0.0
        %1697 = vmatprep.subr.mxu0 0.0
        %1698 = vmatpush1.msra.mxu0 0.0
        %1699 = vmatprep.subr.mxu0 0.0
        %1700 = vmatpush1.msra.mxu0 0.0
        %1701 = vmatprep.subr.mxu0 0.0
        %1702 = vmatpush1.msra.mxu0 0.0
        %1703 = vmatprep.subr.mxu0 0.0
        %1704 = vmatpush1.msra.mxu0 0.0
        %1705 = vmatprep.subr.mxu0 0.0
        %1706 = vmatpush1.msra.mxu0 0.0
        %1707 = vmatprep.subr.mxu0 0.0
        %1708 = vmatpush1.msra.mxu0 0.0
        %1709 = vmatprep.subr.mxu0 0.0
        %1710 = vmatpush1.msra.mxu0 0.0
        %1711 = vmatprep.subr.mxu0 0.0
        %1712 = vmatpush1.msra.mxu0 0.0
        %1713 = vmatprep.subr.mxu0 0.0
        %1714 = vmatpush1.msra.mxu0 0.0
        %1715 = vmatprep.subr.mxu0 0.0
        %1716 = vmatpush1.msra.mxu0 %v1681
        %1717 = vmatprep.subr.mxu0 0.0
        %1718 = vmatpush2.msra.mxu0 0.0
        %1719 = vmatprep.subr.mxu0 0.0
        %1720 = vmatpush2.msra.mxu0 0.0
        %1721 = vmatprep.subr.mxu0 0.0
        %1722 = vmatpush2.msra.mxu0 0.0
        %1723 = vmatprep.subr.mxu0 0.0
        %1724 = vmatpush2.msra.mxu0 0.0
        %1725 = vmatprep.subr.mxu0 0.0
        %1726 = vmatpush2.msra.mxu0 0.0
        %1727 = vmatprep.subr.mxu0 0.0
        %1728 = vmatpush2.msra.mxu0 0.0
        %1729 = vmatprep.subr.mxu0 0.0
        %1730 = vmatpush2.msra.mxu0 0.0
        %1731 = vmatprep.subr.mxu0 0.0
        %1732 = vmatpush2.msra.mxu0 0.0
        %1733 = vmatprep.subr.mxu0 0.0
        %1734 = vmatpush2.msra.mxu0 0.0
        %1735 = vmatprep.subr.mxu0 0.0
        %1736 = vmatpush2.msra.mxu0 0.0
        %1737 = vmatprep.subr.mxu0 0.0
        %1738 = vmatpush2.msra.mxu0 0.0
        %1739 = vmatprep.subr.mxu0 0.0
        %1740 = vmatpush2.msra.mxu0 0.0
        %1741 = vmatprep.subr.mxu0 0.0
        %1742 = vmatpush2.msra.mxu0 0.0
        %1743 = vmatprep.subr.mxu0 0.0
        %1744 = vmatpush2.msra.mxu0 0.0
        %1745 = vmatprep.subr.mxu0 0.0
        %1746 = vmatpush2.msra.mxu0 0.0
        %1747 = vmatprep.subr.mxu0 0.0
        %1748 = vmatpush2.msra.mxu0 0.0
        %1749 = vmatprep.mubr.f32.mxu0 0.0
        %1750 = vmatmul.mubr.f32.gmra.mxu0 %v1683
        %v1751 = vpop.f32.mrf.mxu0
        %v1752 = vadd.f32 0.0, %v1751
        %v1753 = vpop.f32.mrf.mxu0
        %1754 = vdwg.mxu0
        %v1755 = vmul.f32 %v1752, %v1752
        %1757 = vrot.lane.b32.xlu0 %v1755, 1
        %v1758 = vpop.permute.xlu0 %1757
        %v1760 = vsub.f32 %v1752, %v1758
        %v1761 = vmax.f32 %v1760, 0.0
        %v1762 = vadd.f32 %v1761, 1e-05
        %v1763 = vrsqrt.pop %v1762
        %1765 = vset.pattern.permute.xlu0 0
        %1766 = vperm.xlu0 %1765, %v1752
        %v1767 = vpop.permute.xlu0 %1766
        %v1769 = vsub.f32 %v1668, %v1767
        %v1770 = vsub.f32 %v1669, %v1767
        %1772 = vrot.lane.b32.xlu0 %v1670, 1
        %v1773 = vpop.permute.xlu0 %1772
        %v1775 = vmul.f32 %v1763, %v1773
        %1777 = vset.pattern.permute.xlu0 1
        %1778 = vperm.xlu0 %1777, %v1775
        %v1779 = vpop.permute.xlu0 %1778
        %v1781 = vmul.f32 %v1769, %v1779
        %v1782 = vmul.f32 %v1770, %v1779
        %1784 = vset.pattern.permute.xlu0 0
        %1785 = vperm.xlu0 %1784, %v1671
        %v1786 = vpop.permute.xlu0 %1785
        %v1788 = vadd.f32 %v1781, %v1786
        %v1789 = vadd.f32 %v1782, %v1786
        %vm1790 = vcmp.gt.f32.partialorder %v1788, 0.0
        %vm1791 = vcmp.gt.f32.partialorder %v1789, 0.0
        %v1792 = vmul.f32 %v1788, 0.2
        %v1793 = vmul.f32 %v1789, 0.2
        %v1794 = vsel %vm1790, %v1788, %v1792
        %v1795 = vsel %vm1791, %v1789, %v1793
        %v1796 = vld [vmem:[%s9] sm:$0xf]
        %v1798 = vsel %vm716, %v1796, 0
        %1800 = vmatprep.subr.mxu0 0.0
        %1801 = vmatpush1.msra.mxu0 0.0
        %1802 = vmatprep.subr.mxu0 0.0
        %1803 = vmatpush1.msra.mxu0 0.0
        %1804 = vmatprep.subr.mxu0 0.0
        %1805 = vmatpush1.msra.mxu0 0.0
        %1806 = vmatprep.subr.mxu0 0.0
        %1807 = vmatpush1.msra.mxu0 0.0
        %1808 = vmatprep.subr.mxu0 0.0
        %1809 = vmatpush1.msra.mxu0 0.0
        %1810 = vmatprep.subr.mxu0 0.0
        %1811 = vmatpush1.msra.mxu0 0.0
        %1812 = vmatprep.subr.mxu0 0.0
        %1813 = vmatpush1.msra.mxu0 0.0
        %1814 = vmatprep.subr.mxu0 0.0
        %1815 = vmatpush1.msra.mxu0 0.0
        %1816 = vmatprep.subr.mxu0 0.0
        %1817 = vmatpush1.msra.mxu0 0.0
        %1818 = vmatprep.subr.mxu0 0.0
        %1819 = vmatpush1.msra.mxu0 0.0
        %1820 = vmatprep.subr.mxu0 0.0
        %1821 = vmatpush1.msra.mxu0 0.0
        %1822 = vmatprep.subr.mxu0 0.0
        %1823 = vmatpush1.msra.mxu0 0.0
        %1824 = vmatprep.subr.mxu0 0.0
        %1825 = vmatpush1.msra.mxu0 0.0
        %1826 = vmatprep.subr.mxu0 0.0
        %1827 = vmatpush1.msra.mxu0 0.0
        %1828 = vmatprep.subr.mxu0 0.0
        %1829 = vmatpush1.msra.mxu0 0.0
        %1830 = vmatprep.subr.mxu0 %v1795
        %1831 = vmatpush1.msra.mxu0 %v1794
        %1832 = vmatprep.subr.mxu0 0.0
        %1833 = vmatpush2.msra.mxu0 0.0
        %1834 = vmatprep.subr.mxu0 0.0
        %1835 = vmatpush2.msra.mxu0 0.0
        %1836 = vmatprep.subr.mxu0 0.0
        %1837 = vmatpush2.msra.mxu0 0.0
        %1838 = vmatprep.subr.mxu0 0.0
        %1839 = vmatpush2.msra.mxu0 0.0
        %1840 = vmatprep.subr.mxu0 0.0
        %1841 = vmatpush2.msra.mxu0 0.0
        %1842 = vmatprep.subr.mxu0 0.0
        %1843 = vmatpush2.msra.mxu0 0.0
        %1844 = vmatprep.subr.mxu0 0.0
        %1845 = vmatpush2.msra.mxu0 0.0
        %1846 = vmatprep.subr.mxu0 0.0
        %1847 = vmatpush2.msra.mxu0 0.0
        %1848 = vmatprep.subr.mxu0 0.0
        %1849 = vmatpush2.msra.mxu0 0.0
        %1850 = vmatprep.subr.mxu0 0.0
        %1851 = vmatpush2.msra.mxu0 0.0
        %1852 = vmatprep.subr.mxu0 0.0
        %1853 = vmatpush2.msra.mxu0 0.0
        %1854 = vmatprep.subr.mxu0 0.0
        %1855 = vmatpush2.msra.mxu0 0.0
        %1856 = vmatprep.subr.mxu0 0.0
        %1857 = vmatpush2.msra.mxu0 0.0
        %1858 = vmatprep.subr.mxu0 0.0
        %1859 = vmatpush2.msra.mxu0 0.0
        %1860 = vmatprep.subr.mxu0 0.0
        %1861 = vmatpush2.msra.mxu0 0.0
        %1862 = vmatprep.subr.mxu0 0.0
        %1863 = vmatpush2.msra.mxu0 0.0
        %1864 = vmatprep.mubr.f32.mxu0 0.0
        %1865 = vmatmul.mubr.f32.gmra.mxu0 %v1798
        %v1866 = vpop.f32.mrf.mxu0
        %v1867 = vadd.f32 0.0, %v1866
        %v1868 = vpop.f32.mrf.mxu0
        %v1869 = vadd.f32 0.0, %v1868
        %1870 = vdwg.mxu0
        %v1873 = vcombine.low %v1867, %v1869
        %1875 = vst [vmem:[%s460] sm:$0xff] %v1873
        %s1876 = sand.u32 %s335, 1
        %s1877 = scalar_lea.sflag [#allocation3], %s1876
        %s1878 = sand.u32 %s335, 1
        %s1879 = smul.addr %s1878, 8
        %s1880 = scalar_lea.vmem [#allocation2], %s1879
        // Predicated region
        $region77: #{tpu_custom_call.1} parent=75 // pred_check
          %p1881 = pneg %p345
        $region78: #{tpu_custom_call.1} parent=75 // pred_check_branch
          %1883 = sbr.rel (%p1881) target = $region80
        $region79: #{tpu_custom_call.1} parent=75 // pred_region
          %s1885 = ssub.s32 128, 128
          %1886 = vsyncadd %s1877, %s1885
          %s1887 = smul.addr %s28, 2
          %s1888 = smul.addr %s1887, 64
          %s1889 = scalar_lea.hbm %s14, %s1888
          %s1891 = sshll.u32 %s1880, 4
          %s1892 = int_to_ptr.vmem [resolvable:$true] %s1891
          %1894 = dma.vmem_to_hbm [thread:$0]  %s1892, 128, %s1889, %s1877
        $region80: #{tpu_custom_call.1} parent=75 // pred_fallthru
          _
      $region76: #{tpu_custom_call.1} parent=5 // pred_fallthru
        _
      %p1895 = scmp.le.s32.totalorder 2, %s23
      // Predicated region
      $region81: #{tpu_custom_call.1} parent=5 // pred_check
        %p1896 = pneg %p1895
      $region82: #{tpu_custom_call.1} parent=5 // pred_check_branch
        %1898 = sbr.rel (%p1896) target = $region84
      $region83: #{tpu_custom_call.1} parent=5 // pred_region
        %s1899 = ssub.s32 %s23, 2
        // Predicated region
        $region85: #{tpu_custom_call.1} parent=83 // pred_check
          %p1900 = pneg %p351
        $region86: #{tpu_custom_call.1} parent=83 // pred_check_branch
          %1902 = sbr.rel (%p1900) target = $region88
        $region87: #{tpu_custom_call.1} parent=83 // pred_region
          %s1903 = sand.u32 %s336, 1
          %s1904 = scalar_lea.sflag [#allocation3], %s1903
          %s1905 = sand.u32 %s336, 1
          %s1906 = smul.addr %s1905, 8
          %s1907 = scalar_lea.vmem [#allocation2], %s1906
          %1908 = dma.done %s1904, 128
        $region88: #{tpu_custom_call.1} parent=83 // pred_fallthru
          _
      $region84: #{tpu_custom_call.1} parent=5 // pred_fallthru
        _
    $region6: #{tpu_custom_call.1} parent=1 // loop_footer
      %s27 = sadd.s32 1, %s23
    $region7: #{tpu_custom_call.1} parent=1 // loop_footer_branch
      %22 = sbr.rel target = $region3
    $region8: #{tpu_custom_call.1} parent=1 // loop_exit
      _
    %1909 = vsyncpa [#allocation3], 1
    %s1910 = scalar_lea.sflag [#allocation3], 1
    %1911 = vsyncpa %s1910, 1

</llo_original>
